<compile_context>
chip_gen: v7x
topology: tpu7x:2x2x1
jax: 0.10.0
libtpu: 0.0.40
codegen_flags: <defaults>
</compile_context>

<pallas_src>
import jax
import jax.numpy as jnp
from jax import lax
from jax.experimental import pallas as pl
from jax.experimental.pallas import tpu as pltpu

LANE = 128
SUBLANE = 8
BF16_SUBLANE = 16   # bf16 packs 2 rows per sublane -> align bf16 slab rows to 16


def _round_up(v, m):
    return (v + m - 1) // m * m


# ---------------------------------------------------------------------------
# Parameter packing: weights -> one lane-dense bf16 slab, biases -> f32 slab.
# ---------------------------------------------------------------------------
def pack_params(params):
    """Pack weights (bf16) and biases (f32) into lane-dense (rows, 128) slabs.

    Pool weights stay in nn.Linear (out, in) layout (used directly by the
    transposed-score einsum); pool biases are stored as columns so they
    broadcast against the (Bt, k, n_nodes) transposed score tensor.  All
    columns beyond a tensor's true width are zero, which makes padding the
    gc3 / pl2 feature dimension to Fo_pad exact and free.
    """
    w_entries = [
        ("gc1_w", params["gc1_w"]),                  # (Fi, Fh)
        ("gc2_w", params["gc2_w"]),                  # (Fh, Fh)
        ("pl1_w", params["pl1_w"]),                  # (Hn, Fh)  nn.Linear (out,in)
        ("gc3_w", params["gc3_w"]),                  # (Fh, Fo)  zero cols up to 128
        ("pl2_w", params["pl2_w"]),                  # (On, Fo)  zero cols up to 128
    ]
    b_entries = [
        ("gc1_b", params["gc1_b"]),                  # (1, Fh)
        ("gc2_b", params["gc2_b"]),                  # (1, Fh)
        ("gc3_b", params["gc3_b"]),                  # (1, Fo)   zero cols up to 128
        ("pl1_b", params["pl1_b"].reshape(-1, 1)),   # (Hn, 1)   column
        ("pl2_b", params["pl2_b"].reshape(-1, 1)),   # (On, 1)   column
    ]

    def build(entries, dtype, row_align):
        offs, blocks, row = {}, [], 0
        for name, arr in entries:
            arr = jnp.asarray(arr, jnp.float32)
            h, w = arr.shape
            if w > LANE:
                raise ValueError(f"{name}: width {w} exceeds slab lane width {LANE}")
            hp = _round_up(h, row_align)
            offs[name] = row
            blk = jnp.zeros((hp, LANE), jnp.float32).at[:h, :w].set(arr)
            blocks.append(blk)
            row += hp
        return jnp.concatenate(blocks, axis=0).astype(dtype), offs

    w_slab, w_offs = build(w_entries, jnp.bfloat16, BF16_SUBLANE)
    b_slab, b_offs = build(b_entries, jnp.float32, SUBLANE)
    return w_slab, w_offs, b_slab, b_offs


# ---------------------------------------------------------------------------
# Kernel (closure over static shapes + slab offsets).
# ---------------------------------------------------------------------------
def _make_kernel(cfg, w_offs, b_offs):
    N = cfg["in_nodes"]
    Hn = cfg["hidden_nodes"]
    On = cfg["out_nodes"]
    Fi = cfg["in_features"]
    Fh = cfg["hidden_features"]
    Fo_pad = cfg["out_features_pad"]
    On_pad = cfg["out_nodes_pad"]
    On_sub = cfg["out_nodes_sub"]

    f32, bf16 = jnp.float32, jnp.bfloat16
    NN = (((1,), (0,)), ((), ()))   # (m,k).(k,n) -> (m,n)

    def kernel(x_ref, adj_ref, w_ref, b_ref, x_out_ref, adj_out_ref):
        def wslc(name, h, w):       # static slice of the resident bf16 weight slab
            r = w_offs[name]
            return w_ref[r:r + h, :w]

        def bslc(name, h, w):       # static slice of the resident f32 bias slab
            r = b_offs[name]
            return b_ref[r:r + h, :w]

        x = x_ref[...].astype(f32)              # (Bt, N, Fi)
        adj_bf = adj_ref[...].astype(bf16)      # hoisted cast: gc1, gc2, pool1

        def gcn(xi, ai_bf, w_bf, b, nonlin):
            # TODO(synk): GCNLayer undefined upstream; assumed out = adj @ (x @ W + b).
            bt, n, fi = xi.shape
            fo = w_bf.shape[1]
            # Shared-weight matmul flattened over batch*nodes -> real MXU M dim.
            support = lax.dot_general(
                xi.reshape(bt * n, fi).astype(bf16), w_bf, NN,
                preferred_element_type=f32) + b                        # (Bt*n, fo)
            support = support.reshape(bt, n, fo)
            out = jnp.einsum("bnm,bmf->bnf", ai_bf, support.astype(bf16),
                             preferred_element_type=f32)               # adj @ support
            return jnp.maximum(out, 0.0) if nonlin else out

        def pool(xi, ai_bf, w_bf, b_col):
            # Transposed scores (Bt, k, n): the node-axis softmax reduces along lanes.
            bt, n, f = xi.shape
            k = w_bf.shape[0]
            xi_bf = xi.astype(bf16)                                    # hoisted (2 uses)
            w_b = jnp.broadcast_to(w_bf, (bt, k, f))
            scores_t = jnp.einsum("bkf,bnf->bkn", w_b, xi_bf,
                                  preferred_element_type=f32) + b_col  # (Bt, k, n)
            m = jnp.max(scores_t, axis=-1, keepdims=True)
            e = jnp.exp(scores_t - m)
            s_t = e / jnp.sum(e, axis=-1, keepdims=True)               # exact softmax, S^T
            s_t_bf = s_t.astype(bf16)
            x_lat = jnp.einsum("bkn,bnf->bkf", s_t_bf, xi_bf,
                               preferred_element_type=f32)             # S^T x
            sa = jnp.einsum("bkn,bnm->bkm", s_t_bf, ai_bf,
                            preferred_element_type=f32)                # S^T A
            sa_bf = sa.astype(bf16)
            a_lat = jnp.einsum("bkm,bjm->bkj", sa_bf, s_t_bf,
                               preferred_element_type=f32)             # (S^T A) S
            # Transpose via a second tiny MXU pass (keeps XLU idle). Both matmuls
            # use the same bf16 products, so the symmetrization matches the
            # reference's explicit transpose.
            a_lat_t = jnp.einsum("bkm,bjm->bkj", s_t_bf, sa_bf,
                                 preferred_element_type=f32)           # S^T A^T S
            return x_lat, 0.5 * (a_lat + a_lat_t)

        h = gcn(x, adj_bf, wslc("gc1_w", Fi, Fh), bslc("gc1_b", 1, Fh), True)
        h = gcn(h, adj_bf, wslc("gc2_w", Fh, Fh), bslc("gc2_b", 1, Fh), True)
        h, a = pool(h, adj_bf, wslc("pl1_w", Hn, Fh), bslc("pl1_b", Hn, 1))
        a_bf = a.astype(bf16)                    # hoisted: gc3 + pool2
        # gc3 weights/bias are zero beyond Fo in the slab -> h comes out already
        # lane-padded to Fo_pad with exact zeros (no in-kernel concatenate).
        h = gcn(h, a_bf, wslc("gc3_w", Fh, Fo_pad), bslc("gc3_b", 1, Fo_pad), False)
        # pl2_w is also zero beyond Fo, so contracting over Fo_pad is exact.
        h, a = pool(h, a_bf, wslc("pl2_w", On, Fo_pad), bslc("pl2_b", On, 1))

        h = jnp.clip(h, 0.0, 1.0)                # (Bt, On, Fo_pad), zeros in pad cols
        a = jnp.clip(a, -1.0, 1.0)               # (Bt, On, On)

        # Lane-dense stores: zero the sublane/lane padding once, then write rows.
        if On_sub > On:
            x_out_ref[...] = jnp.zeros_like(x_out_ref)
        if On_sub > On or On_pad > On:
            adj_out_ref[...] = jnp.zeros_like(adj_out_ref)
        x_out_ref[:, :On, :] = h
        adj_out_ref[:, :On, :On] = a

    return kernel


def _flops_per_graph(N, Fi, Fh, Fo, Hn, On):
    f = 2 * N * Fi * Fh + 2 * N * N * Fh                       # gc1
    f += 2 * N * Fh * Fh + 2 * N * N * Fh                      # gc2
    f += 2 * Hn * Fh * N + 2 * Hn * N * Fh + 2 * Hn * N * N + 4 * Hn * N * Hn   # pool1
    f += 2 * Hn * Fh * Fo + 2 * Hn * Hn * Fo                   # gc3
    f += 2 * On * Fo * Hn + 2 * On * Hn * Fo + 2 * On * Hn * Hn + 4 * On * Hn * On  # pool2
    return f


def _pick_batch_tile(B, N, bytes_per_graph):
    # Target ~256 flattened rows (2x256x256 MXU on v6e/v7x; 128 already fills
    # v5e's 4x128x128), keep >=2 grid steps so v7x's two TensorCores both get a
    # share of the "parallel" batch axis, and cap Bt so the double-buffered
    # in+out blocks stay well under v7x's 64 MiB physical VMEM.
    bt = max(1, min(B, max(1, 256 // max(N, 1))))
    if B >= 2:
        bt = min(bt, max(1, B // 2))
    vmem_budget = 40 * 1024 * 1024
    bt = min(bt, max(1, vmem_budget // (2 * max(bytes_per_graph, 1))))
    return max(1, bt)


# ---------------------------------------------------------------------------
# Wrapper
# ---------------------------------------------------------------------------
def graph_encoder(x, adj, params):
    B, N, Fi = x.shape
    Fh = params["gc1_w"].shape[1]
    Hn = params["pl1_w"].shape[0]
    Fo = params["gc3_w"].shape[1]
    On = params["pl2_w"].shape[0]
    Fo_pad = _round_up(Fo, LANE)
    On_pad = _round_up(On, LANE)
    On_sub = _round_up(On, SUBLANE)

    w_slab, w_offs, b_slab, b_offs = pack_params(params)

    bytes_per_graph = 4 * (N * Fi + N * N + On_sub * Fo_pad + On_sub * On_pad)
    Bt = _pick_batch_tile(B, N, bytes_per_graph)

    B_pad = _round_up(B, Bt)
    if B_pad != B:
        x = jnp.concatenate([x, jnp.zeros((B_pad - B, N, Fi), x.dtype)], axis=0)
        adj = jnp.concatenate([adj, jnp.zeros((B_pad - B, N, N), adj.dtype)], axis=0)
    num_steps = B_pad // Bt

    cfg = dict(in_nodes=N, hidden_nodes=Hn, out_nodes=On,
               in_features=Fi, hidden_features=Fh, out_features=Fo,
               out_features_pad=Fo_pad, out_nodes_pad=On_pad,
               out_nodes_sub=On_sub, batch_tile=Bt)
    kernel = _make_kernel(cfg, w_offs, b_offs)

    out_shape = (
        jax.ShapeDtypeStruct((B_pad, On_sub, Fo_pad), jnp.float32),
        jax.ShapeDtypeStruct((B_pad, On_sub, On_pad), jnp.float32),
    )
    in_specs = [
        pl.BlockSpec((Bt, N, Fi), lambda b: (b, 0, 0)),      # Bt graphs of features
        pl.BlockSpec((Bt, N, N), lambda b: (b, 0, 0)),       # Bt adjacencies
        pl.BlockSpec(w_slab.shape, lambda b: (0, 0)),        # bf16 weights: VMEM-resident
        pl.BlockSpec(b_slab.shape, lambda b: (0, 0)),        # f32 biases:   VMEM-resident
    ]
    out_specs = (
        pl.BlockSpec((Bt, On_sub, Fo_pad), lambda b: (b, 0, 0)),
        pl.BlockSpec((Bt, On_sub, On_pad), lambda b: (b, 0, 0)),
    )

    flops = B_pad * _flops_per_graph(N, Fi, Fh, Fo_pad, Hn, On)
    transcendentals = B_pad * (Hn * N + On * Hn)
    bytes_accessed = (x.size * 4 + adj.size * 4 + w_slab.size * 2 + b_slab.size * 4
                      + B_pad * On_sub * (Fo_pad + On_pad) * 4)

    x_out, adj_out = pl.pallas_call(
        kernel,
        out_shape=out_shape,
        grid=(num_steps,),
        in_specs=in_specs,
        out_specs=out_specs,
        compiler_params=pltpu.CompilerParams(
            dimension_semantics=("parallel",),
            vmem_limit_bytes=48 * 1024 * 1024),
        cost_estimate=pl.CostEstimate(
            flops=int(flops),
            transcendentals=int(transcendentals),
            bytes_accessed=int(bytes_accessed)),
    )(x, adj, w_slab, b_slab)

    return x_out[:B, :On, :Fo], adj_out[:B, :On, :On]


# ---------------------------------------------------------------------------
# Parameters + pure-JAX reference (same bf16-matmul / f32-accumulate policy)
# ---------------------------------------------------------------------------
def init_params(key, in_features, hidden_features, out_features,
                hidden_nodes, out_nodes):
    ks = jax.random.split(key, 10)

    def glorot(k, shape):
        fan_in, fan_out = shape[-2], shape[-1]
        scale = jnp.sqrt(2.0 / (fan_in + fan_out))
        return (scale * jax.random.normal(k, shape)).astype(jnp.float32)

    return dict(
        gc1_w=glorot(ks[0], (in_features, hidden_features)),
        gc1_b=jnp.zeros((1, hidden_features), jnp.float32),
        gc2_w=glorot(ks[1], (hidden_features, hidden_features)),
        gc2_b=jnp.zeros((1, hidden_features), jnp.float32),
        pl1_w=glorot(ks[2], (hidden_nodes, hidden_features)),   # nn.Linear (out, in)
        pl1_b=(0.01 * jax.random.normal(ks[3], (1, hidden_nodes))).astype(jnp.float32),
        gc3_w=glorot(ks[4], (hidden_features, out_features)),
        gc3_b=jnp.zeros((1, out_features), jnp.float32),
        pl2_w=glorot(ks[5], (out_nodes, out_features)),         # nn.Linear (out, in)
        pl2_b=(0.01 * jax.random.normal(ks[6], (1, out_nodes))).astype(jnp.float32),
    )


def _reference_single(x, adj, params):
    f32, bf16 = jnp.float32, jnp.bfloat16

    def mm(a, b):
        return jnp.dot(a.astype(bf16), b.astype(bf16), preferred_element_type=f32)

    def gcn(xi, ai, w, b, nonlin):
        out = mm(ai, mm(xi, w) + b)
        return jnp.maximum(out, 0.0) if nonlin else out

    def pool(xi, ai, w, b):
        scores = mm(xi, w.T) + b
        s = jax.nn.softmax(scores, axis=0)
        x_lat = mm(s.T, xi)
        a_lat = mm(mm(s.T, ai), s)
        return x_lat, 0.5 * (a_lat + a_lat.T)

    h = gcn(x, adj, params["gc1_w"], params["gc1_b"], True)
    h = gcn(h, adj, params["gc2_w"], params["gc2_b"], True)
    h, a = pool(h, adj, params["pl1_w"], params["pl1_b"])
    h = gcn(h, a, params["gc3_w"], params["gc3_b"], False)
    h, a = pool(h, a, params["pl2_w"], params["pl2_b"])
    return jnp.clip(h, 0.0, 1.0), jnp.clip(a, -1.0, 1.0)


if __name__ == "__main__":
    B = 4
    in_nodes, hidden_nodes, out_nodes = 16, 8, 4
    in_features, hidden_features, out_features = 8, 32, 16

    key = jax.random.PRNGKey(0)
    k_x, k_a, k_p = jax.random.split(key, 3)

    x = jax.random.normal(k_x, (B, in_nodes, in_features), jnp.float32)
    a = jax.random.uniform(k_a, (B, in_nodes, in_nodes), jnp.float32)
    adj = 0.5 * (a + jnp.swapaxes(a, -1, -2))   # symmetric adjacency per graph

    params = init_params(k_p, in_features, hidden_features, out_features,
                         hidden_nodes, out_nodes)

    run = jax.jit(graph_encoder)
    x_out, adj_out = run(x, adj, params)
    jax.block_until_ready((x_out, adj_out))

    # Reference (pure JAX, same bf16-matmul policy) for correctness.
    x_ref, adj_ref = jax.vmap(lambda xi, ai: _reference_single(xi, ai, params))(x, adj)

    assert x_out.shape == (B, out_nodes, out_features)
    assert adj_out.shape == (B, out_nodes, out_nodes)
    assert bool(jnp.all(x_out >= 0.0) & jnp.all(x_out <= 1.0))
    assert bool(jnp.all(adj_out >= -1.0) & jnp.all(adj_out <= 1.0))
    assert bool(jnp.allclose(x_out, x_ref, atol=2e-2)), \
        f"x max diff {float(jnp.max(jnp.abs(x_out - x_ref)))}"
    assert bool(jnp.allclose(adj_out, adj_ref, atol=2e-2)), \
        f"adj max diff {float(jnp.max(jnp.abs(adj_out - adj_ref)))}"

    print("KERNEL_OK")
</pallas_src>

<mosaic_0001>
module attributes {stable_mosaic.version = 11 : i64} {
  func.func @kernel(%arg0: i32, %arg1: memref<2x16x8xf32, #tpu.memory_space<vmem>>, %arg2: memref<2x16x16xf32, #tpu.memory_space<vmem>>, %arg3: memref<112x128xbf16, #tpu.memory_space<vmem>>, %arg4: memref<40x128xf32, #tpu.memory_space<vmem>>, %arg5: memref<2x8x128xf32, #tpu.memory_space<vmem>>, %arg6: memref<2x8x128xf32, #tpu.memory_space<vmem>>) attributes {dimension_semantics = [#tpu.dimension_semantics<parallel>], iteration_bounds = array<i64: 2>, scalar_prefetch = 0 : i64, scratch_operands = 0 : i64, tpu.core_type = #tpu.core_type<tc>, window_params = [{transform_indices = @transform_0, window_bounds = array<i64: 2, 16, 8>}, {transform_indices = @transform_1, window_bounds = array<i64: 2, 16, 16>}, {pipeline_mode = #tpu.pipeline_mode<synchronous>, transform_indices = @transform_2, window_bounds = array<i64: 112, 128>}, {pipeline_mode = #tpu.pipeline_mode<synchronous>, transform_indices = @transform_3, window_bounds = array<i64: 40, 128>}, {transform_indices = @transform_4, window_bounds = array<i64: 2, 8, 128>}, {transform_indices = @transform_5, window_bounds = array<i64: 2, 8, 128>}]} {
    %c0 = arith.constant 0 : index
    %c0_0 = arith.constant 0 : index
    %c0_1 = arith.constant 0 : index
    %0 = vector.load %arg1[%c0, %c0_0, %c0_1] : memref<2x16x8xf32, #tpu.memory_space<vmem>>, vector<2x16x8xf32>
    %c0_2 = arith.constant 0 : index
    %c0_3 = arith.constant 0 : index
    %c0_4 = arith.constant 0 : index
    %1 = vector.load %arg2[%c0_2, %c0_3, %c0_4] : memref<2x16x16xf32, #tpu.memory_space<vmem>>, vector<2x16x16xf32>
    %2 = arith.truncf %1 : vector<2x16x16xf32> to vector<2x16x16xbf16>
    %c0_5 = arith.constant 0 : index
    %c0_6 = arith.constant 0 : index
    %3 = vector.load %arg3[%c0_5, %c0_6] : memref<112x128xbf16, #tpu.memory_space<vmem>>, vector<8x32xbf16>
    %c0_7 = arith.constant 0 : index
    %c0_8 = arith.constant 0 : index
    %4 = vector.load %arg4[%c0_7, %c0_8] : memref<40x128xf32, #tpu.memory_space<vmem>>, vector<1x32xf32>
    %5 = vector.shape_cast %0 : vector<2x16x8xf32> to vector<32x8xf32>
    %6 = arith.truncf %5 : vector<32x8xf32> to vector<32x8xbf16>
    %cst = arith.constant dense<0.000000e+00> : vector<32x32xf32>
    %7 = tpu.matmul %6, %3, %cst {dimension_numbers = #tpu.dot_dimension_numbers<[1], [0], [0], [1], [0, 0, 1, 1], [], []>} : vector<32x8xbf16>, vector<8x32xbf16>, vector<32x32xf32> -> vector<32x32xf32>
    %8 = vector.broadcast %4 : vector<1x32xf32> to vector<32x32xf32>
    %9 = arith.addf %7, %8 : vector<32x32xf32>
    %10 = vector.shape_cast %9 : vector<32x32xf32> to vector<2x16x32xf32>
    %11 = arith.truncf %10 : vector<2x16x32xf32> to vector<2x16x32xbf16>
    "tpu.trace_start"() <{level = 10 : i32, message = "bnm,bmf->bnf"}> : () -> ()
    %cst_9 = arith.constant dense<0.000000e+00> : vector<2x16x32xf32>
    %12 = tpu.matmul %2, %11, %cst_9 {dimension_numbers = #tpu.dot_dimension_numbers<[2], [1], [1], [2], [0, 0, 0, 1, 1, 2], [0], [0]>} : vector<2x16x16xbf16>, vector<2x16x32xbf16>, vector<2x16x32xf32> -> vector<2x16x32xf32>
    "tpu.trace_stop"() : () -> ()
    %cst_10 = arith.constant 0.000000e+00 : f32
    %13 = vector.broadcast %cst_10 : f32 to vector<2x16x32xf32>
    %14 = arith.maximumf %12, %13 : vector<2x16x32xf32>
    %c16 = arith.constant 16 : index
    %c0_11 = arith.constant 0 : index
    %15 = vector.load %arg3[%c16, %c0_11] : memref<112x128xbf16, #tpu.memory_space<vmem>>, vector<32x32xbf16>
    %c8 = arith.constant 8 : index
    %c0_12 = arith.constant 0 : index
    %16 = vector.load %arg4[%c8, %c0_12] : memref<40x128xf32, #tpu.memory_space<vmem>>, vector<1x32xf32>
    %17 = vector.shape_cast %14 : vector<2x16x32xf32> to vector<32x32xf32>
    %18 = arith.truncf %17 : vector<32x32xf32> to vector<32x32xbf16>
    %cst_13 = arith.constant dense<0.000000e+00> : vector<32x32xf32>
    %19 = tpu.matmul %18, %15, %cst_13 {dimension_numbers = #tpu.dot_dimension_numbers<[1], [0], [0], [1], [0, 0, 1, 1], [], []>} : vector<32x32xbf16>, vector<32x32xbf16>, vector<32x32xf32> -> vector<32x32xf32>
    %20 = vector.broadcast %16 : vector<1x32xf32> to vector<32x32xf32>
    %21 = arith.addf %19, %20 : vector<32x32xf32>
    %22 = vector.shape_cast %21 : vector<32x32xf32> to vector<2x16x32xf32>
    %23 = arith.truncf %22 : vector<2x16x32xf32> to vector<2x16x32xbf16>
    "tpu.trace_start"() <{level = 10 : i32, message = "bnm,bmf->bnf"}> : () -> ()
    %cst_14 = arith.constant dense<0.000000e+00> : vector<2x16x32xf32>
    %24 = tpu.matmul %2, %23, %cst_14 {dimension_numbers = #tpu.dot_dimension_numbers<[2], [1], [1], [2], [0, 0, 0, 1, 1, 2], [0], [0]>} : vector<2x16x16xbf16>, vector<2x16x32xbf16>, vector<2x16x32xf32> -> vector<2x16x32xf32>
    "tpu.trace_stop"() : () -> ()
    %cst_15 = arith.constant 0.000000e+00 : f32
    %25 = vector.broadcast %cst_15 : f32 to vector<2x16x32xf32>
    %26 = arith.maximumf %24, %25 : vector<2x16x32xf32>
    %c48 = arith.constant 48 : index
    %c0_16 = arith.constant 0 : index
    %27 = vector.load %arg3[%c48, %c0_16] : memref<112x128xbf16, #tpu.memory_space<vmem>>, vector<8x32xbf16>
    %c24 = arith.constant 24 : index
    %c0_17 = arith.constant 0 : index
    %28 = vector.load %arg4[%c24, %c0_17] : memref<40x128xf32, #tpu.memory_space<vmem>>, vector<8x1xf32>
    %29 = arith.truncf %26 : vector<2x16x32xf32> to vector<2x16x32xbf16>
    %30 = vector.shape_cast %27 : vector<8x32xbf16> to vector<1x8x32xbf16>
    %31 = vector.broadcast %30 : vector<1x8x32xbf16> to vector<2x8x32xbf16>
    "tpu.trace_start"() <{level = 10 : i32, message = "bkf,bnf->bkn"}> : () -> ()
    %cst_18 = arith.constant dense<0.000000e+00> : vector<2x8x16xf32>
    %32 = tpu.matmul %31, %29, %cst_18 {dimension_numbers = #tpu.dot_dimension_numbers<[2], [2], [1], [1], [0, 0, 0, 1, 1, 1], [0], [0]>} : vector<2x8x32xbf16>, vector<2x16x32xbf16>, vector<2x8x16xf32> -> vector<2x8x16xf32>
    "tpu.trace_stop"() : () -> ()
    %33 = vector.shape_cast %28 : vector<8x1xf32> to vector<1x8x1xf32>
    %34 = vector.broadcast %33 : vector<1x8x1xf32> to vector<2x8x16xf32>
    %35 = arith.addf %32, %34 : vector<2x8x16xf32>
    %cst_19 = arith.constant dense<0xFF800000> : vector<2x8xf32>
    %36 = vector.multi_reduction <maximumf>, %35, %cst_19 [2] : vector<2x8x16xf32> to vector<2x8xf32>
    %37 = vector.shape_cast %36 : vector<2x8xf32> to vector<2x8x1xf32>
    %38 = vector.broadcast %37 : vector<2x8x1xf32> to vector<2x8x16xf32>
    %39 = arith.subf %35, %38 : vector<2x8x16xf32>
    %40 = math.exp %39 : vector<2x8x16xf32>
    %cst_20 = arith.constant dense<0.000000e+00> : vector<2x8xf32>
    %41 = vector.multi_reduction <add>, %40, %cst_20 [2] : vector<2x8x16xf32> to vector<2x8xf32>
    %42 = vector.shape_cast %41 : vector<2x8xf32> to vector<2x8x1xf32>
    %43 = vector.broadcast %42 : vector<2x8x1xf32> to vector<2x8x16xf32>
    %44 = arith.divf %40, %43 : vector<2x8x16xf32>
    %45 = arith.truncf %44 : vector<2x8x16xf32> to vector<2x8x16xbf16>
    "tpu.trace_start"() <{level = 10 : i32, message = "bkn,bnf->bkf"}> : () -> ()
    %cst_21 = arith.constant dense<0.000000e+00> : vector<2x8x32xf32>
    %46 = tpu.matmul %45, %29, %cst_21 {dimension_numbers = #tpu.dot_dimension_numbers<[2], [1], [1], [2], [0, 0, 0, 1, 1, 2], [0], [0]>} : vector<2x8x16xbf16>, vector<2x16x32xbf16>, vector<2x8x32xf32> -> vector<2x8x32xf32>
    "tpu.trace_stop"() : () -> ()
    "tpu.trace_start"() <{level = 10 : i32, message = "bkn,bnm->bkm"}> : () -> ()
    %cst_22 = arith.constant dense<0.000000e+00> : vector<2x8x16xf32>
    %47 = tpu.matmul %45, %2, %cst_22 {dimension_numbers = #tpu.dot_dimension_numbers<[2], [1], [1], [2], [0, 0, 0, 1, 1, 2], [0], [0]>} : vector<2x8x16xbf16>, vector<2x16x16xbf16>, vector<2x8x16xf32> -> vector<2x8x16xf32>
    "tpu.trace_stop"() : () -> ()
    %48 = arith.truncf %47 : vector<2x8x16xf32> to vector<2x8x16xbf16>
    "tpu.trace_start"() <{level = 10 : i32, message = "bkm,bjm->bkj"}> : () -> ()
    %cst_23 = arith.constant dense<0.000000e+00> : vector<2x8x8xf32>
    %49 = tpu.matmul %48, %45, %cst_23 {dimension_numbers = #tpu.dot_dimension_numbers<[2], [2], [1], [1], [0, 0, 0, 1, 1, 1], [0], [0]>} : vector<2x8x16xbf16>, vector<2x8x16xbf16>, vector<2x8x8xf32> -> vector<2x8x8xf32>
    %cst_24 = arith.constant dense<0.000000e+00> : vector<2x8x8xf32>
    %50 = tpu.matmul %45, %48, %cst_24 {dimension_numbers = #tpu.dot_dimension_numbers<[2], [2], [1], [1], [0, 0, 0, 1, 1, 1], [0], [0]>} : vector<2x8x16xbf16>, vector<2x8x16xbf16>, vector<2x8x8xf32> -> vector<2x8x8xf32>
    "tpu.trace_stop"() : () -> ()
    %51 = arith.addf %49, %50 : vector<2x8x8xf32>
    %cst_25 = arith.constant 5.000000e-01 : f32
    %52 = vector.broadcast %cst_25 : f32 to vector<2x8x8xf32>
    %53 = arith.mulf %52, %51 : vector<2x8x8xf32>
    %54 = arith.truncf %53 : vector<2x8x8xf32> to vector<2x8x8xbf16>
    %c64 = arith.constant 64 : index
    %c0_26 = arith.constant 0 : index
    %55 = vector.load %arg3[%c64, %c0_26] : memref<112x128xbf16, #tpu.memory_space<vmem>>, vector<32x128xbf16>
    %c16_27 = arith.constant 16 : index
    %c0_28 = arith.constant 0 : index
    %56 = vector.load %arg4[%c16_27, %c0_28] : memref<40x128xf32, #tpu.memory_space<vmem>>, vector<1x128xf32>
    %57 = vector.shape_cast %46 : vector<2x8x32xf32> to vector<16x32xf32>
    %58 = arith.truncf %57 : vector<16x32xf32> to vector<16x32xbf16>
    %cst_29 = arith.constant dense<0.000000e+00> : vector<16x128xf32>
    %59 = tpu.matmul %58, %55, %cst_29 {dimension_numbers = #tpu.dot_dimension_numbers<[1], [0], [0], [1], [0, 0, 1, 1], [], []>} : vector<16x32xbf16>, vector<32x128xbf16>, vector<16x128xf32> -> vector<16x128xf32>
    %60 = vector.broadcast %56 : vector<1x128xf32> to vector<16x128xf32>
    %61 = arith.addf %59, %60 : vector<16x128xf32>
    %62 = vector.shape_cast %61 : vector<16x128xf32> to vector<2x8x128xf32>
    %63 = arith.truncf %62 : vector<2x8x128xf32> to vector<2x8x128xbf16>
    "tpu.trace_start"() <{level = 10 : i32, message = "bnm,bmf->bnf"}> : () -> ()
    %cst_30 = arith.constant dense<0.000000e+00> : vector<2x8x128xf32>
    %64 = tpu.matmul %54, %63, %cst_30 {dimension_numbers = #tpu.dot_dimension_numbers<[2], [1], [1], [2], [0, 0, 0, 1, 1, 2], [0], [0]>} : vector<2x8x8xbf16>, vector<2x8x128xbf16>, vector<2x8x128xf32> -> vector<2x8x128xf32>
    "tpu.trace_stop"() : () -> ()
    %c96 = arith.constant 96 : index
    %c0_31 = arith.constant 0 : index
    %65 = vector.load %arg3[%c96, %c0_31] : memref<112x128xbf16, #tpu.memory_space<vmem>>, vector<4x128xbf16>
    %c32 = arith.constant 32 : index
    %c0_32 = arith.constant 0 : index
    %66 = vector.load %arg4[%c32, %c0_32] : memref<40x128xf32, #tpu.memory_space<vmem>>, vector<4x1xf32>
    %67 = arith.truncf %64 : vector<2x8x128xf32> to vector<2x8x128xbf16>
    %68 = vector.shape_cast %65 : vector<4x128xbf16> to vector<1x4x128xbf16>
    %69 = vector.broadcast %68 : vector<1x4x128xbf16> to vector<2x4x128xbf16>
    "tpu.trace_start"() <{level = 10 : i32, message = "bkf,bnf->bkn"}> : () -> ()
    %cst_33 = arith.constant dense<0.000000e+00> : vector<2x4x8xf32>
    %70 = tpu.matmul %69, %67, %cst_33 {dimension_numbers = #tpu.dot_dimension_numbers<[2], [2], [1], [1], [0, 0, 0, 1, 1, 1], [0], [0]>} : vector<2x4x128xbf16>, vector<2x8x128xbf16>, vector<2x4x8xf32> -> vector<2x4x8xf32>
    "tpu.trace_stop"() : () -> ()
    %71 = vector.shape_cast %66 : vector<4x1xf32> to vector<1x4x1xf32>
    %72 = vector.broadcast %71 : vector<1x4x1xf32> to vector<2x4x8xf32>
    %73 = arith.addf %70, %72 : vector<2x4x8xf32>
    %cst_34 = arith.constant dense<0xFF800000> : vector<2x4xf32>
    %74 = vector.multi_reduction <maximumf>, %73, %cst_34 [2] : vector<2x4x8xf32> to vector<2x4xf32>
    %75 = vector.shape_cast %74 : vector<2x4xf32> to vector<2x4x1xf32>
    %76 = vector.broadcast %75 : vector<2x4x1xf32> to vector<2x4x8xf32>
    %77 = arith.subf %73, %76 : vector<2x4x8xf32>
    %78 = math.exp %77 : vector<2x4x8xf32>
    %cst_35 = arith.constant dense<0.000000e+00> : vector<2x4xf32>
    %79 = vector.multi_reduction <add>, %78, %cst_35 [2] : vector<2x4x8xf32> to vector<2x4xf32>
    %80 = vector.shape_cast %79 : vector<2x4xf32> to vector<2x4x1xf32>
    %81 = vector.broadcast %80 : vector<2x4x1xf32> to vector<2x4x8xf32>
    %82 = arith.divf %78, %81 : vector<2x4x8xf32>
    %83 = arith.truncf %82 : vector<2x4x8xf32> to vector<2x4x8xbf16>
    "tpu.trace_start"() <{level = 10 : i32, message = "bkn,bnf->bkf"}> : () -> ()
    %cst_36 = arith.constant dense<0.000000e+00> : vector<2x4x128xf32>
    %84 = tpu.matmul %83, %67, %cst_36 {dimension_numbers = #tpu.dot_dimension_numbers<[2], [1], [1], [2], [0, 0, 0, 1, 1, 2], [0], [0]>} : vector<2x4x8xbf16>, vector<2x8x128xbf16>, vector<2x4x128xf32> -> vector<2x4x128xf32>
    "tpu.trace_stop"() : () -> ()
    "tpu.trace_start"() <{level = 10 : i32, message = "bkn,bnm->bkm"}> : () -> ()
    %cst_37 = arith.constant dense<0.000000e+00> : vector<2x4x8xf32>
    %85 = tpu.matmul %83, %54, %cst_37 {dimension_numbers = #tpu.dot_dimension_numbers<[2], [1], [1], [2], [0, 0, 0, 1, 1, 2], [0], [0]>} : vector<2x4x8xbf16>, vector<2x8x8xbf16>, vector<2x4x8xf32> -> vector<2x4x8xf32>
    "tpu.trace_stop"() : () -> ()
    %86 = arith.truncf %85 : vector<2x4x8xf32> to vector<2x4x8xbf16>
    "tpu.trace_start"() <{level = 10 : i32, message = "bkm,bjm->bkj"}> : () -> ()
    %cst_38 = arith.constant dense<0.000000e+00> : vector<2x4x4xf32>
    %87 = tpu.matmul %86, %83, %cst_38 {dimension_numbers = #tpu.dot_dimension_numbers<[2], [2], [1], [1], [0, 0, 0, 1, 1, 1], [0], [0]>} : vector<2x4x8xbf16>, vector<2x4x8xbf16>, vector<2x4x4xf32> -> vector<2x4x4xf32>
    %cst_39 = arith.constant dense<0.000000e+00> : vector<2x4x4xf32>
    %88 = tpu.matmul %83, %86, %cst_39 {dimension_numbers = #tpu.dot_dimension_numbers<[2], [2], [1], [1], [0, 0, 0, 1, 1, 1], [0], [0]>} : vector<2x4x8xbf16>, vector<2x4x8xbf16>, vector<2x4x4xf32> -> vector<2x4x4xf32>
    "tpu.trace_stop"() : () -> ()
    %89 = arith.addf %87, %88 : vector<2x4x4xf32>
    %cst_40 = arith.constant 5.000000e-01 : f32
    %90 = vector.broadcast %cst_40 : f32 to vector<2x4x4xf32>
    %91 = arith.mulf %90, %89 : vector<2x4x4xf32>
    %cst_41 = arith.constant 0.000000e+00 : f32
    %cst_42 = arith.constant 1.000000e+00 : f32
    %92 = vector.broadcast %cst_41 : f32 to vector<2x4x128xf32>
    %93 = arith.maximumf %92, %84 : vector<2x4x128xf32>
    %94 = vector.broadcast %cst_42 : f32 to vector<2x4x128xf32>
    %95 = arith.minimumf %94, %93 : vector<2x4x128xf32>
    %cst_43 = arith.constant -1.000000e+00 : f32
    %cst_44 = arith.constant 1.000000e+00 : f32
    %96 = vector.broadcast %cst_43 : f32 to vector<2x4x4xf32>
    %97 = arith.maximumf %96, %91 : vector<2x4x4xf32>
    %98 = vector.broadcast %cst_44 : f32 to vector<2x4x4xf32>
    %99 = arith.minimumf %98, %97 : vector<2x4x4xf32>
    %cst_45 = arith.constant 0.000000e+00 : f32
    %100 = vector.broadcast %cst_45 : f32 to vector<2x8x128xf32>
    %c0_46 = arith.constant 0 : index
    %c0_47 = arith.constant 0 : index
    %c0_48 = arith.constant 0 : index
    %101 = vector.load %arg5[%c0_46, %c0_47, %c0_48] : memref<2x8x128xf32, #tpu.memory_space<vmem>>, vector<2x8x128xf32>
    tpu.vector_store %arg5[%c0_46, %c0_47, %c0_48], %100 {strides = array<i32>} : memref<2x8x128xf32, #tpu.memory_space<vmem>>, vector<2x8x128xf32>,
    %cst_49 = arith.constant 0.000000e+00 : f32
    %102 = vector.broadcast %cst_49 : f32 to vector<2x8x128xf32>
    %c0_50 = arith.constant 0 : index
    %c0_51 = arith.constant 0 : index
    %c0_52 = arith.constant 0 : index
    %103 = vector.load %arg6[%c0_50, %c0_51, %c0_52] : memref<2x8x128xf32, #tpu.memory_space<vmem>>, vector<2x8x128xf32>
    tpu.vector_store %arg6[%c0_50, %c0_51, %c0_52], %102 {strides = array<i32>} : memref<2x8x128xf32, #tpu.memory_space<vmem>>, vector<2x8x128xf32>,
    %c0_53 = arith.constant 0 : index
    %c0_54 = arith.constant 0 : index
    %c0_55 = arith.constant 0 : index
    %104 = vector.load %arg5[%c0_53, %c0_54, %c0_55] : memref<2x8x128xf32, #tpu.memory_space<vmem>>, vector<2x4x128xf32>
    tpu.vector_store %arg5[%c0_53, %c0_54, %c0_55], %95 {strides = array<i32>} : memref<2x8x128xf32, #tpu.memory_space<vmem>>, vector<2x4x128xf32>,
    %c0_56 = arith.constant 0 : index
    %c0_57 = arith.constant 0 : index
    %c0_58 = arith.constant 0 : index
    %105 = vector.load %arg6[%c0_56, %c0_57, %c0_58] : memref<2x8x128xf32, #tpu.memory_space<vmem>>, vector<2x4x4xf32>
    tpu.vector_store %arg6[%c0_56, %c0_57, %c0_58], %99 {strides = array<i32>} : memref<2x8x128xf32, #tpu.memory_space<vmem>>, vector<2x4x4xf32>,
    return
  }
  func.func @transform_0(%arg0: i32) -> (i32, i32, i32) {
    %c0_i32 = arith.constant 0 : i32
    %c0_i32_0 = arith.constant 0 : i32
    %c0_i32_1 = arith.constant 0 : i32
    return %arg0, %c0_i32, %c0_i32_0 : i32, i32, i32
  }
  func.func @transform_1(%arg0: i32) -> (i32, i32, i32) {
    %c0_i32 = arith.constant 0 : i32
    %c0_i32_0 = arith.constant 0 : i32
    %c0_i32_1 = arith.constant 0 : i32
    return %arg0, %c0_i32, %c0_i32_0 : i32, i32, i32
  }
  func.func @transform_2(%arg0: i32) -> (i32, i32) {
    %c0_i32 = arith.constant 0 : i32
    %c0_i32_0 = arith.constant 0 : i32
    %c0_i32_1 = arith.constant 0 : i32
    return %c0_i32, %c0_i32_0 : i32, i32
  }
  func.func @transform_3(%arg0: i32) -> (i32, i32) {
    %c0_i32 = arith.constant 0 : i32
    %c0_i32_0 = arith.constant 0 : i32
    %c0_i32_1 = arith.constant 0 : i32
    return %c0_i32, %c0_i32_0 : i32, i32
  }
  func.func @transform_4(%arg0: i32) -> (i32, i32, i32) {
    %c0_i32 = arith.constant 0 : i32
    %c0_i32_0 = arith.constant 0 : i32
    %c0_i32_1 = arith.constant 0 : i32
    return %arg0, %c0_i32, %c0_i32_0 : i32, i32, i32
  }
  func.func @transform_5(%arg0: i32) -> (i32, i32, i32) {
    %c0_i32 = arith.constant 0 : i32
    %c0_i32_0 = arith.constant 0 : i32
    %c0_i32_1 = arith.constant 0 : i32
    return %arg0, %c0_i32, %c0_i32_0 : i32, i32, i32
  }
}

</mosaic_0001>

<llo_original>
// kernel: graph_encoder.1
$region0: #{graph_encoder.1}
  #allocation0 [shape = 'u32[]', space=smem, size = 0x4, offset = 0x4, fixed_abs, tag = 'smem constant byte address 0x4 - core index']
  #allocation1 [shape = 'u32[144,128]{1,0:T(1,128)}', space=vmem, size = 0x12000, scoped, tag = 'internal scratch']
  %s0 = inlined_call_operand.vmem [shape: f32[4,16,8], index: 0, kind: input, shape index: {}]
  %s1 = inlined_call_operand.vmem [shape: f32[4,16,16], index: 1, kind: input, shape index: {}]
  %s2 = inlined_call_operand.vmem [shape: bf16[112,128], index: 2, kind: input, shape index: {}]
  %s3 = inlined_call_operand.vmem [shape: f32[40,128], index: 3, kind: input, shape index: {}]
  %s4 = inlined_call_operand.vmem [shape: f32[4,8,128], index: 4, kind: output, shape index: {0}]
  %s5 = inlined_call_operand.vmem [shape: f32[4,8,128], index: 5, kind: output, shape index: {1}]
  %6 = xla_tuple %s4, %s5
  %s7 = sld [smem:[#allocation0]]
  $region57: #{graph_encoder.1} parent=0
    _
  %s9 = ssub.s32 1, %s7
  %s10 = scalar_select 0, %s9, %s7
  loop: start=0, step=1, limit=4
  $region2: #{graph_encoder.1} parent=0 // loop_pre_header
    _
  $region3: #{graph_encoder.1} parent=0 // loop_header
    %s12 = sphi 0, %s16
    %p13 = scmp.ge.s32.totalorder %s12, 4
    %s22 = sphi 0, %s24
    %s25 = sphi 0, %s22
    %s26 = sphi 0, %s25
    %s42 = sphi 0, %s26
    %s48 = sphi 0, %s50
    %s51 = sphi 0, %s48
    %s52 = sphi 0, %s51
    %s68 = sphi 0, %s52
    %s72 = sphi 0, %s72
    %s74 = sphi 0, %s72
    %s75 = sphi 0, %s74
    %s89 = sphi 0, %s75
    %s93 = sphi 0, %s93
    %s95 = sphi 0, %s93
    %s96 = sphi 0, %s95
    %s110 = sphi 0, %s96
    %s116 = sphi 0, %s118
    %s119 = sphi 0, %s116
    %s120 = sphi 0, %s119
    %s136 = sphi 0, %s120
    %s142 = sphi 0, %s144
    %s145 = sphi 0, %s142
    %s146 = sphi 0, %s145
    %s162 = sphi 0, %s146
  $region4: #{graph_encoder.1} parent=0 // loop_header_branch
    %15 = sbr.rel (%p13) target = $region8
  $region5: #{graph_encoder.1} parent=0 // loop_body
    %s17 = ssub.s32 %s12, 1
    %s18 = ssub.s32 %s12, 2
    %s19 = sadd.s32 %s12, 1
    %s20 = ssub.s32 %s12, %s19
    %p21 = scmp.eq.s32.totalorder %s20, 0
    %s23 = sadd.s32 %s22, 1
    %s24 = scalar_select %p21, %s22, %s23
    %p27 = pneg %p21
    %p28 = scmp.eq.s32.totalorder %s12, 1
    %p29 = por %p27, %p28
    %p30 = scmp.ne.s32.totalorder %s22, %s25
    %p31 = scmp.eq.s32.totalorder %s12, 0
    %p32 = por %p30, %p31
    %p33 = scmp.ne.s32.totalorder %s22, %s25
    %p34 = scmp.eq.s32.totalorder %s17, 1
    %p35 = por %p33, %p34
    %p36 = scmp.ne.s32.totalorder %s25, %s26
    %p37 = scmp.eq.s32.totalorder %s17, 0
    %p38 = por %p36, %p37
    %p39 = scmp.ne.s32.totalorder %s25, %s26
    %p40 = scmp.eq.s32.totalorder %s18, 1
    %p41 = por %p39, %p40
    %p43 = scmp.ne.s32.totalorder %s26, %s42
    %p44 = scmp.eq.s32.totalorder %s18, 0
    %p45 = por %p43, %p44
    %s46 = ssub.s32 %s12, %s19
    %p47 = scmp.eq.s32.totalorder %s46, 0
    %s49 = sadd.s32 %s48, 1
    %s50 = scalar_select %p47, %s48, %s49
    %p53 = pneg %p47
    %p54 = scmp.eq.s32.totalorder %s12, 1
    %p55 = por %p53, %p54
    %p56 = scmp.ne.s32.totalorder %s48, %s51
    %p57 = scmp.eq.s32.totalorder %s12, 0
    %p58 = por %p56, %p57
    %p59 = scmp.ne.s32.totalorder %s48, %s51
    %p60 = scmp.eq.s32.totalorder %s17, 1
    %p61 = por %p59, %p60
    %p62 = scmp.ne.s32.totalorder %s51, %s52
    %p63 = scmp.eq.s32.totalorder %s17, 0
    %p64 = por %p62, %p63
    %p65 = scmp.ne.s32.totalorder %s51, %s52
    %p66 = scmp.eq.s32.totalorder %s18, 1
    %p67 = por %p65, %p66
    %p69 = scmp.ne.s32.totalorder %s52, %s68
    %p70 = scmp.eq.s32.totalorder %s18, 0
    %p71 = por %p69, %p70
    %s73 = sadd.s32 %s72, 1
    %p76 = scmp.eq.s32.totalorder %s12, 1
    %p77 = scmp.ne.s32.totalorder %s72, %s74
    %p78 = scmp.eq.s32.totalorder %s12, 0
    %p79 = por %p77, %p78
    %p80 = scmp.ne.s32.totalorder %s72, %s74
    %p81 = scmp.eq.s32.totalorder %s17, 1
    %p82 = por %p80, %p81
    %p83 = scmp.ne.s32.totalorder %s74, %s75
    %p84 = scmp.eq.s32.totalorder %s17, 0
    %p85 = por %p83, %p84
    %p86 = scmp.ne.s32.totalorder %s74, %s75
    %p87 = scmp.eq.s32.totalorder %s18, 1
    %p88 = por %p86, %p87
    %p90 = scmp.ne.s32.totalorder %s75, %s89
    %p91 = scmp.eq.s32.totalorder %s18, 0
    %p92 = por %p90, %p91
    %s94 = sadd.s32 %s93, 1
    %p97 = scmp.eq.s32.totalorder %s12, 1
    %p98 = scmp.ne.s32.totalorder %s93, %s95
    %p99 = scmp.eq.s32.totalorder %s12, 0
    %p100 = por %p98, %p99
    %p101 = scmp.ne.s32.totalorder %s93, %s95
    %p102 = scmp.eq.s32.totalorder %s17, 1
    %p103 = por %p101, %p102
    %p104 = scmp.ne.s32.totalorder %s95, %s96
    %p105 = scmp.eq.s32.totalorder %s17, 0
    %p106 = por %p104, %p105
    %p107 = scmp.ne.s32.totalorder %s95, %s96
    %p108 = scmp.eq.s32.totalorder %s18, 1
    %p109 = por %p107, %p108
    %p111 = scmp.ne.s32.totalorder %s96, %s110
    %p112 = scmp.eq.s32.totalorder %s18, 0
    %p113 = por %p111, %p112
    %s114 = ssub.s32 %s12, %s19
    %p115 = scmp.eq.s32.totalorder %s114, 0
    %s117 = sadd.s32 %s116, 1
    %s118 = scalar_select %p115, %s116, %s117
    %p121 = pneg %p115
    %p122 = scmp.eq.s32.totalorder %s12, 1
    %p123 = por %p121, %p122
    %p124 = scmp.ne.s32.totalorder %s116, %s119
    %p125 = scmp.eq.s32.totalorder %s12, 0
    %p126 = por %p124, %p125
    %p127 = scmp.ne.s32.totalorder %s116, %s119
    %p128 = scmp.eq.s32.totalorder %s17, 1
    %p129 = por %p127, %p128
    %p130 = scmp.ne.s32.totalorder %s119, %s120
    %p131 = scmp.eq.s32.totalorder %s17, 0
    %p132 = por %p130, %p131
    %p133 = scmp.ne.s32.totalorder %s119, %s120
    %p134 = scmp.eq.s32.totalorder %s18, 1
    %p135 = por %p133, %p134
    %p137 = scmp.ne.s32.totalorder %s120, %s136
    %p138 = scmp.eq.s32.totalorder %s18, 0
    %p139 = por %p137, %p138
    %s140 = ssub.s32 %s12, %s19
    %p141 = scmp.eq.s32.totalorder %s140, 0
    %s143 = sadd.s32 %s142, 1
    %s144 = scalar_select %p141, %s142, %s143
    %p147 = pneg %p141
    %p148 = scmp.eq.s32.totalorder %s12, 1
    %p149 = por %p147, %p148
    %p150 = scmp.ne.s32.totalorder %s142, %s145
    %p151 = scmp.eq.s32.totalorder %s12, 0
    %p152 = por %p150, %p151
    %p153 = scmp.ne.s32.totalorder %s142, %s145
    %p154 = scmp.eq.s32.totalorder %s17, 1
    %p155 = por %p153, %p154
    %p156 = scmp.ne.s32.totalorder %s145, %s146
    %p157 = scmp.eq.s32.totalorder %s17, 0
    %p158 = por %p156, %p157
    %p159 = scmp.ne.s32.totalorder %s145, %s146
    %p160 = scmp.eq.s32.totalorder %s18, 1
    %p161 = por %p159, %p160
    %p163 = scmp.ne.s32.totalorder %s146, %s162
    %p164 = scmp.eq.s32.totalorder %s18, 0
    %p165 = por %p163, %p164
    %p166 = scmp.le.s32.totalorder 1, %s12
    %p167 = scmp.lt.s32.totalorder %s12, 3
    %p168 = pnand %p166, %p167
    %p169 = pneg %p168
    // Predicated region
    $region9: #{graph_encoder.1} parent=5 // pred_check
      _
    $region10: #{graph_encoder.1} parent=5 // pred_check_branch
      %171 = sbr.rel (%p168) target = $region12
    $region11: #{graph_encoder.1} parent=5 // pred_region
      %s172 = ssub.s32 %s12, 1
      // Predicated region
      $region13: #{graph_encoder.1} parent=11 // pred_check
        %p173 = pneg %p85
      $region14: #{graph_encoder.1} parent=11 // pred_check_branch
        %175 = sbr.rel (%p173) target = $region16
      $region15: #{graph_encoder.1} parent=11 // pred_region
        _
      $region16: #{graph_encoder.1} parent=11 // pred_fallthru
        _
      // Predicated region
      $region17: #{graph_encoder.1} parent=11 // pred_check
        %p176 = pneg %p106
      $region18: #{graph_encoder.1} parent=11 // pred_check_branch
        %178 = sbr.rel (%p176) target = $region20
      $region19: #{graph_encoder.1} parent=11 // pred_region
        _
      $region20: #{graph_encoder.1} parent=11 // pred_fallthru
        _
    $region12: #{graph_encoder.1} parent=5 // pred_fallthru
      _
    %p179 = scmp.lt.s32.totalorder %s12, 2
    // Predicated region
    $region21: #{graph_encoder.1} parent=5 // pred_check
      %p180 = pneg %p179
    $region22: #{graph_encoder.1} parent=5 // pred_check_branch
      %182 = sbr.rel (%p180) target = $region24
    $region23: #{graph_encoder.1} parent=5 // pred_region
      // Predicated region
      $region25: #{graph_encoder.1} parent=23 // pred_check
        %p183 = pneg %p32
      $region26: #{graph_encoder.1} parent=23 // pred_check_branch
        %185 = sbr.rel (%p183) target = $region28
      $region27: #{graph_encoder.1} parent=23 // pred_region
        %s186 = smul.u32 2, %s12
        %p187 = scmp.lt.s32.totalorder %s186, 3
        %s188 = scalar_select %p187, %s186, 3
        %s189 = smul.addr %s188, 2
        %s190 = smul.addr %s189, 8
        %s191 = scalar_lea.vmem %s0, %s190
        %s192 = smul.u32 2, %s12
      $region28: #{graph_encoder.1} parent=23 // pred_fallthru
        _
      // Predicated region
      $region29: #{graph_encoder.1} parent=23 // pred_check
        %p193 = pneg %p58
      $region30: #{graph_encoder.1} parent=23 // pred_check_branch
        %195 = sbr.rel (%p193) target = $region32
      $region31: #{graph_encoder.1} parent=23 // pred_region
        %s196 = smul.u32 2, %s12
        %p197 = scmp.lt.s32.totalorder %s196, 3
        %s198 = scalar_select %p197, %s196, 3
        %s199 = smul.addr %s198, 2
        %s200 = smul.addr %s199, 8
        %s201 = scalar_lea.vmem %s1, %s200
        %s202 = smul.u32 2, %s12
      $region32: #{graph_encoder.1} parent=23 // pred_fallthru
        _
    $region24: #{graph_encoder.1} parent=5 // pred_fallthru
      _
    %p203 = scmp.le.s32.totalorder 1, %s12
    %p204 = scmp.lt.s32.totalorder %s12, 3
    %p205 = pnand %p203, %p204
    %p206 = pneg %p205
    // Predicated region
    $region33: #{graph_encoder.1} parent=5 // pred_check
      _
    $region34: #{graph_encoder.1} parent=5 // pred_check_branch
      %208 = sbr.rel (%p205) target = $region36
    $region35: #{graph_encoder.1} parent=5 // pred_region
      %s209 = ssub.s32 %s12, 1
      %s210 = smul.u32 2, %s17
      %p211 = scmp.lt.s32.totalorder %s210, 3
      %s212 = scalar_select %p211, %s210, 3
      %s213 = smul.addr %s212, 2
      %s214 = smul.addr %s213, 8
      %s215 = scalar_lea.vmem %s0, %s214
      %p216 = pneg %p38
      %p217 = pneg %p35
      %s218 = smul.u32 2, %s17
      %p219 = scmp.lt.s32.totalorder %s218, 3
      %s220 = scalar_select %p219, %s218, 3
      %s221 = smul.addr %s220, 2
      %s222 = smul.addr %s221, 8
      %s223 = scalar_lea.vmem %s1, %s222
      %p224 = pneg %p64
      %p225 = pneg %p61
      %p226 = pneg %p85
      %p227 = pneg %p82
      %p228 = pneg %p106
      %p229 = pneg %p103
      %p230 = pneg %p132
      %p231 = pneg %p129
      %s232 = smul.u32 2, %s17
      %p233 = scmp.lt.s32.totalorder %s232, 3
      %s234 = scalar_select %p233, %s232, 3
      %s235 = smul.addr %s234, 8
      %s236 = scalar_lea.vmem %s4, %s235
      %p237 = pneg %p158
      %p238 = pneg %p155
      %s239 = smul.u32 2, %s17
      %p240 = scmp.lt.s32.totalorder %s239, 3
      %s241 = scalar_select %p240, %s239, 3
      %s242 = smul.addr %s241, 8
      %s243 = scalar_lea.vmem %s5, %s242
      %s244 = smul.u32 2, %s17
      %p245 = scmp.lt.s32.totalorder %s244, 3
      %s246 = scalar_select %p245, %s244, 3
      %s247 = smul.addr %s246, 2
      %s248 = smul.addr %s247, 8
      %s249 = scalar_lea.vmem %s0, %s248
      %s250 = smul.u32 2, %s17
      %s251 = smul.u32 2, %s17
      %p252 = scmp.lt.s32.totalorder %s251, 3
      %s253 = scalar_select %p252, %s251, 3
      %s254 = smul.addr %s253, 2
      %s255 = smul.addr %s254, 8
      %s256 = scalar_lea.vmem %s1, %s255
      %s257 = smul.u32 2, %s17
      %s258 = smul.u32 2, %s17
      %p259 = scmp.lt.s32.totalorder %s258, 3
      %s260 = scalar_select %p259, %s258, 3
      %s261 = smul.addr %s260, 8
      %s262 = scalar_lea.vmem %s4, %s261
      %s263 = smul.u32 2, %s17
      %s264 = smul.u32 2, %s17
      %p265 = scmp.lt.s32.totalorder %s264, 3
      %s266 = scalar_select %p265, %s264, 3
      %s267 = smul.addr %s266, 8
      %s268 = scalar_lea.vmem %s5, %s267
      %s269 = smul.u32 2, %s17
      %v271 = vld [vmem:[%s249] sm:$0xff]
      %v272 = vld [vmem:[%s249 + $0x8] sm:$0xff]
      %v273 = vld [vmem:[%s249 + $0x10] sm:$0xff]
      %v274 = vld [vmem:[%s249 + $0x18] sm:$0xff]
      %v275 = vld [vmem:[%s256] sm:$0xff]
      %v276 = vld [vmem:[%s256 + $0x8] sm:$0xff]
      %v277 = vld [vmem:[%s256 + $0x10] sm:$0xff]
      %v278 = vld [vmem:[%s256 + $0x18] sm:$0xff]
      %v279 = vpack.c.bf16 %v276, %v275
      %v280 = vpack.c.bf16 %v278, %v277
      %v281 = vld [vmem:[%s2] sm:$0xf]
      %v282 = vld [vmem:[%s3] sm:$0x1]
      %v283 = vpack.c.bf16 %v272, %v271
      %v284 = vpack.c.bf16 %v274, %v273
      %v285 = vlaneseq
      %v286 = vshrl.u32 %v285, 7
      %v287 = vsub.s32 0, %v286
      %v288 = vrot.slane %v282, %v287
      %vm289 = vcmask 64512
      %v291 = vsel %vm289, %v283, 0
      %v294 = vsel %vm289, %v284, 0
      %vm296 = vcmask 1043456
      %v298 = vsel %vm296, %v281, 0
      %300 = vmatprep.subr.bf16.mxu0 0
      %301 = vmatpush1.bf16.msra.mxu0 %v298
      %302 = vmatprep.subr.bf16.mxu0 0
      %303 = vmatpush1.bf16.msra.mxu0 0
      %304 = vmatprep.subr.bf16.mxu0 0
      %305 = vmatpush1.bf16.msra.mxu0 0
      %306 = vmatprep.subr.bf16.mxu0 0
      %307 = vmatpush1.bf16.msra.mxu0 0
      %308 = vmatprep.subr.bf16.mxu0 0
      %309 = vmatpush1.bf16.msra.mxu0 0
      %310 = vmatprep.subr.bf16.mxu0 0
      %311 = vmatpush1.bf16.msra.mxu0 0
      %312 = vmatprep.subr.bf16.mxu0 0
      %313 = vmatpush1.bf16.msra.mxu0 0
      %314 = vmatprep.subr.bf16.mxu0 0
      %315 = vmatpush1.bf16.msra.mxu0 0
      %316 = vmatprep.subr.bf16.mxu0 0
      %317 = vmatpush1.bf16.msra.mxu0 0
      %318 = vmatprep.subr.bf16.mxu0 0
      %319 = vmatpush1.bf16.msra.mxu0 0
      %320 = vmatprep.subr.bf16.mxu0 0
      %321 = vmatpush1.bf16.msra.mxu0 0
      %322 = vmatprep.subr.bf16.mxu0 0
      %323 = vmatpush1.bf16.msra.mxu0 0
      %324 = vmatprep.subr.bf16.mxu0 0
      %325 = vmatpush1.bf16.msra.mxu0 0
      %326 = vmatprep.subr.bf16.mxu0 0
      %327 = vmatpush1.bf16.msra.mxu0 0
      %328 = vmatprep.subr.bf16.mxu0 0
      %329 = vmatpush1.bf16.msra.mxu0 0
      %330 = vmatprep.subr.bf16.mxu0 0
      %331 = vmatpush1.bf16.msra.mxu0 0
      %332 = vmatprep.mubr.bf16.mxu0 0
      %333 = vmatmul.mubr.bf16.gmra.mrb[0].mxu0 %v291
      %v334 = vpop.f32.mrb[0].mxu0
      %v335 = vadd.f32 %v288, %v334
      %v336 = vpop.f32.mrb[0].mxu0
      %v337 = vpop.f32.mrb[0].mxu0
      %v338 = vadd.f32 %v288, %v337
      %v339 = vpop.f32.mrb[0].mxu0
      %340 = vmatprep.mubr.bf16.mxu0 0
      %341 = vmatmul.mubr.bf16.gmra.mrb[0].mxu0 %v294
      %v342 = vpop.f32.mrb[0].mxu0
      %v343 = vadd.f32 %v288, %v342
      %v344 = vpop.f32.mrb[0].mxu0
      %v345 = vpop.f32.mrb[0].mxu0
      %v346 = vadd.f32 %v288, %v345
      %v347 = vpop.f32.mrb[0].mxu0
      %348 = vdwg.mxu0
      %v349 = vpack.c.bf16 %v338, %v335
      %v350 = vpack.c.bf16 %v346, %v343
      %vm351 = vcmask 130048
      %v353 = vsel %vm351, %v279, 0
      %355 = vmatprep.subr.bf16.mxu0 0
      %356 = vmatpush1.bf16.msra.mxu0 %v349
      %357 = vmatprep.subr.bf16.mxu0 0
      %358 = vmatpush1.bf16.msra.mxu0 0
      %359 = vmatprep.subr.bf16.mxu0 0
      %360 = vmatpush1.bf16.msra.mxu0 0
      %361 = vmatprep.subr.bf16.mxu0 0
      %362 = vmatpush1.bf16.msra.mxu0 0
      %363 = vmatprep.subr.bf16.mxu0 0
      %364 = vmatpush1.bf16.msra.mxu0 0
      %365 = vmatprep.subr.bf16.mxu0 0
      %366 = vmatpush1.bf16.msra.mxu0 0
      %367 = vmatprep.subr.bf16.mxu0 0
      %368 = vmatpush1.bf16.msra.mxu0 0
      %369 = vmatprep.subr.bf16.mxu0 0
      %370 = vmatpush1.bf16.msra.mxu0 0
      %371 = vmatprep.subr.bf16.mxu0 0
      %372 = vmatpush1.bf16.msra.mxu0 0
      %373 = vmatprep.subr.bf16.mxu0 0
      %374 = vmatpush1.bf16.msra.mxu0 0
      %375 = vmatprep.subr.bf16.mxu0 0
      %376 = vmatpush1.bf16.msra.mxu0 0
      %377 = vmatprep.subr.bf16.mxu0 0
      %378 = vmatpush1.bf16.msra.mxu0 0
      %379 = vmatprep.subr.bf16.mxu0 0
      %380 = vmatpush1.bf16.msra.mxu0 0
      %381 = vmatprep.subr.bf16.mxu0 0
      %382 = vmatpush1.bf16.msra.mxu0 0
      %383 = vmatprep.subr.bf16.mxu0 0
      %384 = vmatpush1.bf16.msra.mxu0 0
      %385 = vmatprep.subr.bf16.mxu0 0
      %386 = vmatpush1.bf16.msra.mxu0 0
      %387 = vmatprep.mubr.bf16.mxu0 0
      %388 = vmatmul.mubr.bf16.gmra.mrb[0].mxu0 %v353
      %v389 = vpop.f32.mrb[0].mxu0
      %v390 = vadd.f32 0.0, %v389
      %v391 = vpop.f32.mrb[0].mxu0
      %v392 = vpop.f32.mrb[0].mxu0
      %v393 = vadd.f32 0.0, %v392
      %v394 = vpop.f32.mrb[0].mxu0
      %395 = vdwg.mxu0
      %v397 = vsel %vm351, %v280, 0
      %399 = vmatprep.subr.bf16.mxu0 0
      %400 = vmatpush1.bf16.msra.mxu0 %v350
      %401 = vmatprep.subr.bf16.mxu0 0
      %402 = vmatpush1.bf16.msra.mxu0 0
      %403 = vmatprep.subr.bf16.mxu0 0
      %404 = vmatpush1.bf16.msra.mxu0 0
      %405 = vmatprep.subr.bf16.mxu0 0
      %406 = vmatpush1.bf16.msra.mxu0 0
      %407 = vmatprep.subr.bf16.mxu0 0
      %408 = vmatpush1.bf16.msra.mxu0 0
      %409 = vmatprep.subr.bf16.mxu0 0
      %410 = vmatpush1.bf16.msra.mxu0 0
      %411 = vmatprep.subr.bf16.mxu0 0
      %412 = vmatpush1.bf16.msra.mxu0 0
      %413 = vmatprep.subr.bf16.mxu0 0
      %414 = vmatpush1.bf16.msra.mxu0 0
      %415 = vmatprep.subr.bf16.mxu0 0
      %416 = vmatpush1.bf16.msra.mxu0 0
      %417 = vmatprep.subr.bf16.mxu0 0
      %418 = vmatpush1.bf16.msra.mxu0 0
      %419 = vmatprep.subr.bf16.mxu0 0
      %420 = vmatpush1.bf16.msra.mxu0 0
      %421 = vmatprep.subr.bf16.mxu0 0
      %422 = vmatpush1.bf16.msra.mxu0 0
      %423 = vmatprep.subr.bf16.mxu0 0
      %424 = vmatpush1.bf16.msra.mxu0 0
      %425 = vmatprep.subr.bf16.mxu0 0
      %426 = vmatpush1.bf16.msra.mxu0 0
      %427 = vmatprep.subr.bf16.mxu0 0
      %428 = vmatpush1.bf16.msra.mxu0 0
      %429 = vmatprep.subr.bf16.mxu0 0
      %430 = vmatpush1.bf16.msra.mxu0 0
      %431 = vmatprep.mubr.bf16.mxu0 0
      %432 = vmatmul.mubr.bf16.gmra.mrb[0].mxu0 %v397
      %v433 = vpop.f32.mrb[0].mxu0
      %v434 = vadd.f32 0.0, %v433
      %v435 = vpop.f32.mrb[0].mxu0
      %v436 = vpop.f32.mrb[0].mxu0
      %v437 = vadd.f32 0.0, %v436
      %v438 = vpop.f32.mrb[0].mxu0
      %439 = vdwg.mxu0
      %v440 = vmax.f32 %v390, 0.0
      %v441 = vmax.f32 %v393, 0.0
      %v442 = vmax.f32 %v434, 0.0
      %v443 = vmax.f32 %v437, 0.0
      %v444 = vld [vmem:[%s2 + $0x8] sm:$0xf]
      %v445 = vld [vmem:[%s2 + $0xc] sm:$0xf]
      %v446 = vld [vmem:[%s2 + $0x10] sm:$0xf]
      %v447 = vld [vmem:[%s2 + $0x14] sm:$0xf]
      %v448 = vld [vmem:[%s3 + $0x8] sm:$0x1]
      %v449 = vpack.c.bf16 %v441, %v440
      %v450 = vpack.c.bf16 %v443, %v442
      %v451 = vlaneseq
      %v452 = vshrl.u32 %v451, 7
      %v453 = vsub.s32 0, %v452
      %v454 = vrot.slane %v448, %v453
      %v459 = vunpack.c.l.b16 %v444
      %v460 = vunpack.c.l.b16 %v445
      %v461 = vunpack.c.l.b16 %v446
      %v462 = vunpack.c.l.b16 %v447
      %v463 = vpack.c.b16 %v460, %v459
      %v464 = vpack.c.b16 %v462, %v461
      %vm467 = vcmask 261120
      %v469 = vsel %vm467, %v449, 0
      %v472 = vsel %vm467, %v450, 0
      %474 = vmatprep.subr.bf16.mxu0 0
      %475 = vmatpush1.bf16.msra.mxu0 %v463
      %476 = vmatprep.subr.bf16.mxu0 0
      %477 = vmatpush1.bf16.msra.mxu0 %v464
      %478 = vmatprep.subr.bf16.mxu0 0
      %479 = vmatpush1.bf16.msra.mxu0 0
      %480 = vmatprep.subr.bf16.mxu0 0
      %481 = vmatpush1.bf16.msra.mxu0 0
      %482 = vmatprep.subr.bf16.mxu0 0
      %483 = vmatpush1.bf16.msra.mxu0 0
      %484 = vmatprep.subr.bf16.mxu0 0
      %485 = vmatpush1.bf16.msra.mxu0 0
      %486 = vmatprep.subr.bf16.mxu0 0
      %487 = vmatpush1.bf16.msra.mxu0 0
      %488 = vmatprep.subr.bf16.mxu0 0
      %489 = vmatpush1.bf16.msra.mxu0 0
      %490 = vmatprep.subr.bf16.mxu0 0
      %491 = vmatpush1.bf16.msra.mxu0 0
      %492 = vmatprep.subr.bf16.mxu0 0
      %493 = vmatpush1.bf16.msra.mxu0 0
      %494 = vmatprep.subr.bf16.mxu0 0
      %495 = vmatpush1.bf16.msra.mxu0 0
      %496 = vmatprep.subr.bf16.mxu0 0
      %497 = vmatpush1.bf16.msra.mxu0 0
      %498 = vmatprep.subr.bf16.mxu0 0
      %499 = vmatpush1.bf16.msra.mxu0 0
      %500 = vmatprep.subr.bf16.mxu0 0
      %501 = vmatpush1.bf16.msra.mxu0 0
      %502 = vmatprep.subr.bf16.mxu0 0
      %503 = vmatpush1.bf16.msra.mxu0 0
      %504 = vmatprep.subr.bf16.mxu0 0
      %505 = vmatpush1.bf16.msra.mxu0 0
      %506 = vmatprep.mubr.bf16.mxu0 0
      %507 = vmatmul.mubr.bf16.gmra.mrb[0].mxu0 %v469
      %v508 = vpop.f32.mrb[0].mxu0
      %v509 = vadd.f32 %v454, %v508
      %v510 = vpop.f32.mrb[0].mxu0
      %v511 = vpop.f32.mrb[0].mxu0
      %v512 = vadd.f32 %v454, %v511
      %v513 = vpop.f32.mrb[0].mxu0
      %514 = vmatprep.mubr.bf16.mxu0 0
      %515 = vmatmul.mubr.bf16.gmra.mrb[0].mxu0 %v472
      %v516 = vpop.f32.mrb[0].mxu0
      %v517 = vadd.f32 %v454, %v516
      %v518 = vpop.f32.mrb[0].mxu0
      %v519 = vpop.f32.mrb[0].mxu0
      %v520 = vadd.f32 %v454, %v519
      %v521 = vpop.f32.mrb[0].mxu0
      %522 = vdwg.mxu0
      %v523 = vpack.c.bf16 %v512, %v509
      %v524 = vpack.c.bf16 %v520, %v517
      %525 = vmatprep.subr.bf16.mxu0 0
      %526 = vmatpush1.bf16.msra.mxu0 %v523
      %527 = vmatprep.subr.bf16.mxu0 0
      %528 = vmatpush1.bf16.msra.mxu0 0
      %529 = vmatprep.subr.bf16.mxu0 0
      %530 = vmatpush1.bf16.msra.mxu0 0
      %531 = vmatprep.subr.bf16.mxu0 0
      %532 = vmatpush1.bf16.msra.mxu0 0
      %533 = vmatprep.subr.bf16.mxu0 0
      %534 = vmatpush1.bf16.msra.mxu0 0
      %535 = vmatprep.subr.bf16.mxu0 0
      %536 = vmatpush1.bf16.msra.mxu0 0
      %537 = vmatprep.subr.bf16.mxu0 0
      %538 = vmatpush1.bf16.msra.mxu0 0
      %539 = vmatprep.subr.bf16.mxu0 0
      %540 = vmatpush1.bf16.msra.mxu0 0
      %541 = vmatprep.subr.bf16.mxu0 0
      %542 = vmatpush1.bf16.msra.mxu0 0
      %543 = vmatprep.subr.bf16.mxu0 0
      %544 = vmatpush1.bf16.msra.mxu0 0
      %545 = vmatprep.subr.bf16.mxu0 0
      %546 = vmatpush1.bf16.msra.mxu0 0
      %547 = vmatprep.subr.bf16.mxu0 0
      %548 = vmatpush1.bf16.msra.mxu0 0
      %549 = vmatprep.subr.bf16.mxu0 0
      %550 = vmatpush1.bf16.msra.mxu0 0
      %551 = vmatprep.subr.bf16.mxu0 0
      %552 = vmatpush1.bf16.msra.mxu0 0
      %553 = vmatprep.subr.bf16.mxu0 0
      %554 = vmatpush1.bf16.msra.mxu0 0
      %555 = vmatprep.subr.bf16.mxu0 0
      %556 = vmatpush1.bf16.msra.mxu0 0
      %557 = vmatprep.mubr.bf16.mxu0 0
      %558 = vmatmul.mubr.bf16.gmra.mrb[0].mxu0 %v353
      %v559 = vpop.f32.mrb[0].mxu0
      %v560 = vadd.f32 0.0, %v559
      %v561 = vpop.f32.mrb[0].mxu0
      %v562 = vpop.f32.mrb[0].mxu0
      %v563 = vadd.f32 0.0, %v562
      %v564 = vpop.f32.mrb[0].mxu0
      %565 = vdwg.mxu0
      %566 = vmatprep.subr.bf16.mxu0 0
      %567 = vmatpush1.bf16.msra.mxu0 %v524
      %568 = vmatprep.subr.bf16.mxu0 0
      %569 = vmatpush1.bf16.msra.mxu0 0
      %570 = vmatprep.subr.bf16.mxu0 0
      %571 = vmatpush1.bf16.msra.mxu0 0
      %572 = vmatprep.subr.bf16.mxu0 0
      %573 = vmatpush1.bf16.msra.mxu0 0
      %574 = vmatprep.subr.bf16.mxu0 0
      %575 = vmatpush1.bf16.msra.mxu0 0
      %576 = vmatprep.subr.bf16.mxu0 0
      %577 = vmatpush1.bf16.msra.mxu0 0
      %578 = vmatprep.subr.bf16.mxu0 0
      %579 = vmatpush1.bf16.msra.mxu0 0
      %580 = vmatprep.subr.bf16.mxu0 0
      %581 = vmatpush1.bf16.msra.mxu0 0
      %582 = vmatprep.subr.bf16.mxu0 0
      %583 = vmatpush1.bf16.msra.mxu0 0
      %584 = vmatprep.subr.bf16.mxu0 0
      %585 = vmatpush1.bf16.msra.mxu0 0
      %586 = vmatprep.subr.bf16.mxu0 0
      %587 = vmatpush1.bf16.msra.mxu0 0
      %588 = vmatprep.subr.bf16.mxu0 0
      %589 = vmatpush1.bf16.msra.mxu0 0
      %590 = vmatprep.subr.bf16.mxu0 0
      %591 = vmatpush1.bf16.msra.mxu0 0
      %592 = vmatprep.subr.bf16.mxu0 0
      %593 = vmatpush1.bf16.msra.mxu0 0
      %594 = vmatprep.subr.bf16.mxu0 0
      %595 = vmatpush1.bf16.msra.mxu0 0
      %596 = vmatprep.subr.bf16.mxu0 0
      %597 = vmatpush1.bf16.msra.mxu0 0
      %598 = vmatprep.mubr.bf16.mxu0 0
      %599 = vmatmul.mubr.bf16.gmra.mrb[0].mxu0 %v397
      %v600 = vpop.f32.mrb[0].mxu0
      %v601 = vadd.f32 0.0, %v600
      %v602 = vpop.f32.mrb[0].mxu0
      %v603 = vpop.f32.mrb[0].mxu0
      %v604 = vadd.f32 0.0, %v603
      %v605 = vpop.f32.mrb[0].mxu0
      %606 = vdwg.mxu0
      %v607 = vmax.f32 %v560, 0.0
      %v608 = vmax.f32 %v563, 0.0
      %v609 = vmax.f32 %v601, 0.0
      %v610 = vmax.f32 %v604, 0.0
      %v611 = vld [vmem:[%s2 + $0x18] sm:$0xf]
      %v612 = vld [vmem:[%s3 + $0x18] sm:$0xff]
      %v613 = vpack.c.bf16 %v608, %v607
      %v614 = vpack.c.bf16 %v610, %v609
      %616 = vset.pattern.permute.xlu0 0
      %617 = vperm.xlu0 %616, %v612
      %v618 = vpop.permute.xlu0 %617
      %v621 = vsel %vm467, %v611, 0
      %v624 = vsel %vm467, %v613, 0
      %626 = vmatprep.subr.bf16.mxu0 0
      %627 = vmatpush1.bf16.xpose.msra.mxu0 %v624
      %628 = vmatprep.subr.bf16.mxu0 0
      %629 = vmatpush1.bf16.xpose.msra.mxu0 0
      %630 = vmatprep.subr.bf16.mxu0 0
      %631 = vmatpush1.bf16.xpose.msra.mxu0 0
      %632 = vmatprep.subr.bf16.mxu0 0
      %633 = vmatpush1.bf16.xpose.msra.mxu0 0
      %634 = vmatprep.subr.bf16.mxu0 0
      %635 = vmatpush1.bf16.xpose.msra.mxu0 0
      %636 = vmatprep.subr.bf16.mxu0 0
      %637 = vmatpush1.bf16.xpose.msra.mxu0 0
      %638 = vmatprep.subr.bf16.mxu0 0
      %639 = vmatpush1.bf16.xpose.msra.mxu0 0
      %640 = vmatprep.subr.bf16.mxu0 0
      %641 = vmatpush1.bf16.xpose.msra.mxu0 0
      %642 = vmatprep.subr.bf16.mxu0 0
      %643 = vmatpush1.bf16.xpose.msra.mxu0 0
      %644 = vmatprep.subr.bf16.mxu0 0
      %645 = vmatpush1.bf16.xpose.msra.mxu0 0
      %646 = vmatprep.subr.bf16.mxu0 0
      %647 = vmatpush1.bf16.xpose.msra.mxu0 0
      %648 = vmatprep.subr.bf16.mxu0 0
      %649 = vmatpush1.bf16.xpose.msra.mxu0 0
      %650 = vmatprep.subr.bf16.mxu0 0
      %651 = vmatpush1.bf16.xpose.msra.mxu0 0
      %652 = vmatprep.subr.bf16.mxu0 0
      %653 = vmatpush1.bf16.xpose.msra.mxu0 0
      %654 = vmatprep.subr.bf16.mxu0 0
      %655 = vmatpush1.bf16.xpose.msra.mxu0 0
      %656 = vmatprep.subr.bf16.mxu0 0
      %657 = vmatpush1.bf16.xpose.msra.mxu0 0
      %658 = vmatprep.mubr.bf16.mxu0 0
      %659 = vmatmul.mubr.bf16.gmra.mrb[0].mxu0 %v621
      %v660 = vpop.f32.mrb[0].mxu0
      %v661 = vadd.f32 %v618, %v660
      %v662 = vpop.f32.mrb[0].mxu0
      %v663 = vpop.f32.mrb[0].mxu0
      %v664 = vpop.f32.mrb[0].mxu0
      %665 = vdwg.mxu0
      %v667 = vsel %vm467, %v614, 0
      %669 = vmatprep.subr.bf16.mxu0 0
      %670 = vmatpush1.bf16.xpose.msra.mxu0 %v667
      %671 = vmatprep.subr.bf16.mxu0 0
      %672 = vmatpush1.bf16.xpose.msra.mxu0 0
      %673 = vmatprep.subr.bf16.mxu0 0
      %674 = vmatpush1.bf16.xpose.msra.mxu0 0
      %675 = vmatprep.subr.bf16.mxu0 0
      %676 = vmatpush1.bf16.xpose.msra.mxu0 0
      %677 = vmatprep.subr.bf16.mxu0 0
      %678 = vmatpush1.bf16.xpose.msra.mxu0 0
      %679 = vmatprep.subr.bf16.mxu0 0
      %680 = vmatpush1.bf16.xpose.msra.mxu0 0
      %681 = vmatprep.subr.bf16.mxu0 0
      %682 = vmatpush1.bf16.xpose.msra.mxu0 0
      %683 = vmatprep.subr.bf16.mxu0 0
      %684 = vmatpush1.bf16.xpose.msra.mxu0 0
      %685 = vmatprep.subr.bf16.mxu0 0
      %686 = vmatpush1.bf16.xpose.msra.mxu0 0
      %687 = vmatprep.subr.bf16.mxu0 0
      %688 = vmatpush1.bf16.xpose.msra.mxu0 0
      %689 = vmatprep.subr.bf16.mxu0 0
      %690 = vmatpush1.bf16.xpose.msra.mxu0 0
      %691 = vmatprep.subr.bf16.mxu0 0
      %692 = vmatpush1.bf16.xpose.msra.mxu0 0
      %693 = vmatprep.subr.bf16.mxu0 0
      %694 = vmatpush1.bf16.xpose.msra.mxu0 0
      %695 = vmatprep.subr.bf16.mxu0 0
      %696 = vmatpush1.bf16.xpose.msra.mxu0 0
      %697 = vmatprep.subr.bf16.mxu0 0
      %698 = vmatpush1.bf16.xpose.msra.mxu0 0
      %699 = vmatprep.subr.bf16.mxu0 0
      %700 = vmatpush1.bf16.xpose.msra.mxu0 0
      %701 = vmatprep.mubr.bf16.mxu0 0
      %702 = vmatmul.mubr.bf16.gmra.mrb[0].mxu0 %v621
      %v703 = vpop.f32.mrb[0].mxu0
      %v704 = vadd.f32 %v618, %v703
      %v705 = vpop.f32.mrb[0].mxu0
      %v706 = vpop.f32.mrb[0].mxu0
      %v707 = vpop.f32.mrb[0].mxu0
      %708 = vdwg.mxu0
      %v709 = vsel %vm351, %v661, -inf
      %710 = vmax.xlane.f32.xlu0 %v709
      %v711 = vpop.xlane.xlu0 %710
      %v712 = vsel %vm351, %v704, -inf
      %713 = vmax.xlane.f32.xlu0 %v712
      %v714 = vpop.xlane.xlu0 %713
      %v715 = vsub.f32 %v661, %v711
      %v716 = vsub.f32 %v704, %v714
      %v717 = vmul.f32 %v715, 1.442695
      %v718 = vpow.pop %v717
      %v719 = vmul.f32 %v716, 1.442695
      %v720 = vpow.pop %v719
      %v721 = vsel %vm351, %v718, 0.0
      %722 = vadd.xlane.f32.xlu0 %v721
      %v723 = vpop.xlane.xlu0 %722
      %v724 = vsel %vm351, %v720, 0.0
      %725 = vadd.xlane.f32.xlu0 %v724
      %v726 = vpop.xlane.xlu0 %725
      %v727 = vrcp.pop %v723
      %v728 = vmul.f32 %v718, %v727
      %v729 = vrcp.pop %v726
      %v730 = vmul.f32 %v720, %v729
      %v731 = vpack.c.bf16 %v728, %v728
      %v732 = vpack.c.bf16 %v730, %v730
      %v734 = vsel %vm351, %v731, 0
      %736 = vmatprep.subr.bf16.mxu0 0
      %737 = vmatpush1.bf16.msra.mxu0 %v613
      %738 = vmatprep.subr.bf16.mxu0 0
      %739 = vmatpush1.bf16.msra.mxu0 0
      %740 = vmatprep.subr.bf16.mxu0 0
      %741 = vmatpush1.bf16.msra.mxu0 0
      %742 = vmatprep.subr.bf16.mxu0 0
      %743 = vmatpush1.bf16.msra.mxu0 0
      %744 = vmatprep.subr.bf16.mxu0 0
      %745 = vmatpush1.bf16.msra.mxu0 0
      %746 = vmatprep.subr.bf16.mxu0 0
      %747 = vmatpush1.bf16.msra.mxu0 0
      %748 = vmatprep.subr.bf16.mxu0 0
      %749 = vmatpush1.bf16.msra.mxu0 0
      %750 = vmatprep.subr.bf16.mxu0 0
      %751 = vmatpush1.bf16.msra.mxu0 0
      %752 = vmatprep.subr.bf16.mxu0 0
      %753 = vmatpush1.bf16.msra.mxu0 0
      %754 = vmatprep.subr.bf16.mxu0 0
      %755 = vmatpush1.bf16.msra.mxu0 0
      %756 = vmatprep.subr.bf16.mxu0 0
      %757 = vmatpush1.bf16.msra.mxu0 0
      %758 = vmatprep.subr.bf16.mxu0 0
      %759 = vmatpush1.bf16.msra.mxu0 0
      %760 = vmatprep.subr.bf16.mxu0 0
      %761 = vmatpush1.bf16.msra.mxu0 0
      %762 = vmatprep.subr.bf16.mxu0 0
      %763 = vmatpush1.bf16.msra.mxu0 0
      %764 = vmatprep.subr.bf16.mxu0 0
      %765 = vmatpush1.bf16.msra.mxu0 0
      %766 = vmatprep.subr.bf16.mxu0 0
      %767 = vmatpush1.bf16.msra.mxu0 0
      %768 = vmatprep.mubr.bf16.mxu0 0
      %769 = vmatmul.mubr.bf16.gmra.mrb[0].mxu0 %v734
      %v770 = vpop.f32.mrb[0].mxu0
      %v771 = vadd.f32 0.0, %v770
      %v772 = vpop.f32.mrb[0].mxu0
      %v773 = vpop.f32.mrb[0].mxu0
      %v774 = vpop.f32.mrb[0].mxu0
      %775 = vdwg.mxu0
      %v777 = vsel %vm351, %v732, 0
      %779 = vmatprep.subr.bf16.mxu0 0
      %780 = vmatpush1.bf16.msra.mxu0 %v614
      %781 = vmatprep.subr.bf16.mxu0 0
      %782 = vmatpush1.bf16.msra.mxu0 0
      %783 = vmatprep.subr.bf16.mxu0 0
      %784 = vmatpush1.bf16.msra.mxu0 0
      %785 = vmatprep.subr.bf16.mxu0 0
      %786 = vmatpush1.bf16.msra.mxu0 0
      %787 = vmatprep.subr.bf16.mxu0 0
      %788 = vmatpush1.bf16.msra.mxu0 0
      %789 = vmatprep.subr.bf16.mxu0 0
      %790 = vmatpush1.bf16.msra.mxu0 0
      %791 = vmatprep.subr.bf16.mxu0 0
      %792 = vmatpush1.bf16.msra.mxu0 0
      %793 = vmatprep.subr.bf16.mxu0 0
      %794 = vmatpush1.bf16.msra.mxu0 0
      %795 = vmatprep.subr.bf16.mxu0 0
      %796 = vmatpush1.bf16.msra.mxu0 0
      %797 = vmatprep.subr.bf16.mxu0 0
      %798 = vmatpush1.bf16.msra.mxu0 0
      %799 = vmatprep.subr.bf16.mxu0 0
      %800 = vmatpush1.bf16.msra.mxu0 0
      %801 = vmatprep.subr.bf16.mxu0 0
      %802 = vmatpush1.bf16.msra.mxu0 0
      %803 = vmatprep.subr.bf16.mxu0 0
      %804 = vmatpush1.bf16.msra.mxu0 0
      %805 = vmatprep.subr.bf16.mxu0 0
      %806 = vmatpush1.bf16.msra.mxu0 0
      %807 = vmatprep.subr.bf16.mxu0 0
      %808 = vmatpush1.bf16.msra.mxu0 0
      %809 = vmatprep.subr.bf16.mxu0 0
      %810 = vmatpush1.bf16.msra.mxu0 0
      %811 = vmatprep.mubr.bf16.mxu0 0
      %812 = vmatmul.mubr.bf16.gmra.mrb[0].mxu0 %v777
      %v813 = vpop.f32.mrb[0].mxu0
      %v814 = vadd.f32 0.0, %v813
      %v815 = vpop.f32.mrb[0].mxu0
      %v816 = vpop.f32.mrb[0].mxu0
      %v817 = vpop.f32.mrb[0].mxu0
      %818 = vdwg.mxu0
      %819 = vmatprep.subr.bf16.mxu0 0
      %820 = vmatpush1.bf16.msra.mxu0 %v279
      %821 = vmatprep.subr.bf16.mxu0 0
      %822 = vmatpush1.bf16.msra.mxu0 0
      %823 = vmatprep.subr.bf16.mxu0 0
      %824 = vmatpush1.bf16.msra.mxu0 0
      %825 = vmatprep.subr.bf16.mxu0 0
      %826 = vmatpush1.bf16.msra.mxu0 0
      %827 = vmatprep.subr.bf16.mxu0 0
      %828 = vmatpush1.bf16.msra.mxu0 0
      %829 = vmatprep.subr.bf16.mxu0 0
      %830 = vmatpush1.bf16.msra.mxu0 0
      %831 = vmatprep.subr.bf16.mxu0 0
      %832 = vmatpush1.bf16.msra.mxu0 0
      %833 = vmatprep.subr.bf16.mxu0 0
      %834 = vmatpush1.bf16.msra.mxu0 0
      %835 = vmatprep.subr.bf16.mxu0 0
      %836 = vmatpush1.bf16.msra.mxu0 0
      %837 = vmatprep.subr.bf16.mxu0 0
      %838 = vmatpush1.bf16.msra.mxu0 0
      %839 = vmatprep.subr.bf16.mxu0 0
      %840 = vmatpush1.bf16.msra.mxu0 0
      %841 = vmatprep.subr.bf16.mxu0 0
      %842 = vmatpush1.bf16.msra.mxu0 0
      %843 = vmatprep.subr.bf16.mxu0 0
      %844 = vmatpush1.bf16.msra.mxu0 0
      %845 = vmatprep.subr.bf16.mxu0 0
      %846 = vmatpush1.bf16.msra.mxu0 0
      %847 = vmatprep.subr.bf16.mxu0 0
      %848 = vmatpush1.bf16.msra.mxu0 0
      %849 = vmatprep.subr.bf16.mxu0 0
      %850 = vmatpush1.bf16.msra.mxu0 0
      %851 = vmatprep.mubr.bf16.mxu0 0
      %852 = vmatmul.mubr.bf16.gmra.mrb[0].mxu0 %v734
      %v853 = vpop.f32.mrb[0].mxu0
      %v854 = vadd.f32 0.0, %v853
      %v855 = vpop.f32.mrb[0].mxu0
      %v856 = vpop.f32.mrb[0].mxu0
      %v857 = vpop.f32.mrb[0].mxu0
      %858 = vdwg.mxu0
      %859 = vmatprep.subr.bf16.mxu0 0
      %860 = vmatpush1.bf16.msra.mxu0 %v280
      %861 = vmatprep.subr.bf16.mxu0 0
      %862 = vmatpush1.bf16.msra.mxu0 0
      %863 = vmatprep.subr.bf16.mxu0 0
      %864 = vmatpush1.bf16.msra.mxu0 0
      %865 = vmatprep.subr.bf16.mxu0 0
      %866 = vmatpush1.bf16.msra.mxu0 0
      %867 = vmatprep.subr.bf16.mxu0 0
      %868 = vmatpush1.bf16.msra.mxu0 0
      %869 = vmatprep.subr.bf16.mxu0 0
      %870 = vmatpush1.bf16.msra.mxu0 0
      %871 = vmatprep.subr.bf16.mxu0 0
      %872 = vmatpush1.bf16.msra.mxu0 0
      %873 = vmatprep.subr.bf16.mxu0 0
      %874 = vmatpush1.bf16.msra.mxu0 0
      %875 = vmatprep.subr.bf16.mxu0 0
      %876 = vmatpush1.bf16.msra.mxu0 0
      %877 = vmatprep.subr.bf16.mxu0 0
      %878 = vmatpush1.bf16.msra.mxu0 0
      %879 = vmatprep.subr.bf16.mxu0 0
      %880 = vmatpush1.bf16.msra.mxu0 0
      %881 = vmatprep.subr.bf16.mxu0 0
      %882 = vmatpush1.bf16.msra.mxu0 0
      %883 = vmatprep.subr.bf16.mxu0 0
      %884 = vmatpush1.bf16.msra.mxu0 0
      %885 = vmatprep.subr.bf16.mxu0 0
      %886 = vmatpush1.bf16.msra.mxu0 0
      %887 = vmatprep.subr.bf16.mxu0 0
      %888 = vmatpush1.bf16.msra.mxu0 0
      %889 = vmatprep.subr.bf16.mxu0 0
      %890 = vmatpush1.bf16.msra.mxu0 0
      %891 = vmatprep.mubr.bf16.mxu0 0
      %892 = vmatmul.mubr.bf16.gmra.mrb[0].mxu0 %v777
      %v893 = vpop.f32.mrb[0].mxu0
      %v894 = vadd.f32 0.0, %v893
      %v895 = vpop.f32.mrb[0].mxu0
      %v896 = vpop.f32.mrb[0].mxu0
      %v897 = vpop.f32.mrb[0].mxu0
      %898 = vdwg.mxu0
      %v899 = vpack.c.bf16 %v854, %v854
      %v900 = vpack.c.bf16 %v894, %v894
      %v902 = vsel %vm351, %v899, 0
      %904 = vmatprep.subr.bf16.mxu0 0
      %905 = vmatpush1.bf16.xpose.msra.mxu0 %v902
      %906 = vmatprep.subr.bf16.mxu0 0
      %907 = vmatpush1.bf16.xpose.msra.mxu0 0
      %908 = vmatprep.subr.bf16.mxu0 0
      %909 = vmatpush1.bf16.xpose.msra.mxu0 0
      %910 = vmatprep.subr.bf16.mxu0 0
      %911 = vmatpush1.bf16.xpose.msra.mxu0 0
      %912 = vmatprep.subr.bf16.mxu0 0
      %913 = vmatpush1.bf16.xpose.msra.mxu0 0
      %914 = vmatprep.subr.bf16.mxu0 0
      %915 = vmatpush1.bf16.xpose.msra.mxu0 0
      %916 = vmatprep.subr.bf16.mxu0 0
      %917 = vmatpush1.bf16.xpose.msra.mxu0 0
      %918 = vmatprep.subr.bf16.mxu0 0
      %919 = vmatpush1.bf16.xpose.msra.mxu0 0
      %920 = vmatprep.subr.bf16.mxu0 0
      %921 = vmatpush1.bf16.xpose.msra.mxu0 0
      %922 = vmatprep.subr.bf16.mxu0 0
      %923 = vmatpush1.bf16.xpose.msra.mxu0 0
      %924 = vmatprep.subr.bf16.mxu0 0
      %925 = vmatpush1.bf16.xpose.msra.mxu0 0
      %926 = vmatprep.subr.bf16.mxu0 0
      %927 = vmatpush1.bf16.xpose.msra.mxu0 0
      %928 = vmatprep.subr.bf16.mxu0 0
      %929 = vmatpush1.bf16.xpose.msra.mxu0 0
      %930 = vmatprep.subr.bf16.mxu0 0
      %931 = vmatpush1.bf16.xpose.msra.mxu0 0
      %932 = vmatprep.subr.bf16.mxu0 0
      %933 = vmatpush1.bf16.xpose.msra.mxu0 0
      %934 = vmatprep.subr.bf16.mxu0 0
      %935 = vmatpush1.bf16.xpose.msra.mxu0 0
      %936 = vmatprep.mubr.bf16.mxu0 0
      %937 = vmatmul.mubr.bf16.gmra.mrb[0].mxu0 %v734
      %v938 = vpop.f32.mrb[0].mxu0
      %v939 = vadd.f32 0.0, %v938
      %v940 = vpop.f32.mrb[0].mxu0
      %v941 = vpop.f32.mrb[0].mxu0
      %v942 = vpop.f32.mrb[0].mxu0
      %943 = vdwg.mxu0
      %v945 = vsel %vm351, %v900, 0
      %947 = vmatprep.subr.bf16.mxu0 0
      %948 = vmatpush1.bf16.xpose.msra.mxu0 %v945
      %949 = vmatprep.subr.bf16.mxu0 0
      %950 = vmatpush1.bf16.xpose.msra.mxu0 0
      %951 = vmatprep.subr.bf16.mxu0 0
      %952 = vmatpush1.bf16.xpose.msra.mxu0 0
      %953 = vmatprep.subr.bf16.mxu0 0
      %954 = vmatpush1.bf16.xpose.msra.mxu0 0
      %955 = vmatprep.subr.bf16.mxu0 0
      %956 = vmatpush1.bf16.xpose.msra.mxu0 0
      %957 = vmatprep.subr.bf16.mxu0 0
      %958 = vmatpush1.bf16.xpose.msra.mxu0 0
      %959 = vmatprep.subr.bf16.mxu0 0
      %960 = vmatpush1.bf16.xpose.msra.mxu0 0
      %961 = vmatprep.subr.bf16.mxu0 0
      %962 = vmatpush1.bf16.xpose.msra.mxu0 0
      %963 = vmatprep.subr.bf16.mxu0 0
      %964 = vmatpush1.bf16.xpose.msra.mxu0 0
      %965 = vmatprep.subr.bf16.mxu0 0
      %966 = vmatpush1.bf16.xpose.msra.mxu0 0
      %967 = vmatprep.subr.bf16.mxu0 0
      %968 = vmatpush1.bf16.xpose.msra.mxu0 0
      %969 = vmatprep.subr.bf16.mxu0 0
      %970 = vmatpush1.bf16.xpose.msra.mxu0 0
      %971 = vmatprep.subr.bf16.mxu0 0
      %972 = vmatpush1.bf16.xpose.msra.mxu0 0
      %973 = vmatprep.subr.bf16.mxu0 0
      %974 = vmatpush1.bf16.xpose.msra.mxu0 0
      %975 = vmatprep.subr.bf16.mxu0 0
      %976 = vmatpush1.bf16.xpose.msra.mxu0 0
      %977 = vmatprep.subr.bf16.mxu0 0
      %978 = vmatpush1.bf16.xpose.msra.mxu0 0
      %979 = vmatprep.mubr.bf16.mxu0 0
      %980 = vmatmul.mubr.bf16.gmra.mrb[0].mxu0 %v777
      %v981 = vpop.f32.mrb[0].mxu0
      %v982 = vadd.f32 0.0, %v981
      %v983 = vpop.f32.mrb[0].mxu0
      %v984 = vpop.f32.mrb[0].mxu0
      %v985 = vpop.f32.mrb[0].mxu0
      %986 = vdwg.mxu0
      %987 = vmatprep.subr.bf16.mxu0 0
      %988 = vmatpush1.bf16.xpose.msra.mxu0 %v734
      %989 = vmatprep.subr.bf16.mxu0 0
      %990 = vmatpush1.bf16.xpose.msra.mxu0 0
      %991 = vmatprep.subr.bf16.mxu0 0
      %992 = vmatpush1.bf16.xpose.msra.mxu0 0
      %993 = vmatprep.subr.bf16.mxu0 0
      %994 = vmatpush1.bf16.xpose.msra.mxu0 0
      %995 = vmatprep.subr.bf16.mxu0 0
      %996 = vmatpush1.bf16.xpose.msra.mxu0 0
      %997 = vmatprep.subr.bf16.mxu0 0
      %998 = vmatpush1.bf16.xpose.msra.mxu0 0
      %999 = vmatprep.subr.bf16.mxu0 0
      %1000 = vmatpush1.bf16.xpose.msra.mxu0 0
      %1001 = vmatprep.subr.bf16.mxu0 0
      %1002 = vmatpush1.bf16.xpose.msra.mxu0 0
      %1003 = vmatprep.subr.bf16.mxu0 0
      %1004 = vmatpush1.bf16.xpose.msra.mxu0 0
      %1005 = vmatprep.subr.bf16.mxu0 0
      %1006 = vmatpush1.bf16.xpose.msra.mxu0 0
      %1007 = vmatprep.subr.bf16.mxu0 0
      %1008 = vmatpush1.bf16.xpose.msra.mxu0 0
      %1009 = vmatprep.subr.bf16.mxu0 0
      %1010 = vmatpush1.bf16.xpose.msra.mxu0 0
      %1011 = vmatprep.subr.bf16.mxu0 0
      %1012 = vmatpush1.bf16.xpose.msra.mxu0 0
      %1013 = vmatprep.subr.bf16.mxu0 0
      %1014 = vmatpush1.bf16.xpose.msra.mxu0 0
      %1015 = vmatprep.subr.bf16.mxu0 0
      %1016 = vmatpush1.bf16.xpose.msra.mxu0 0
      %1017 = vmatprep.subr.bf16.mxu0 0
      %1018 = vmatpush1.bf16.xpose.msra.mxu0 0
      %1019 = vmatprep.mubr.bf16.mxu0 0
      %1020 = vmatmul.mubr.bf16.gmra.mrb[0].mxu0 %v902
      %v1021 = vpop.f32.mrb[0].mxu0
      %v1022 = vadd.f32 %v939, %v1021
      %v1023 = vpop.f32.mrb[0].mxu0
      %v1024 = vpop.f32.mrb[0].mxu0
      %v1025 = vpop.f32.mrb[0].mxu0
      %1026 = vdwg.mxu0
      %1027 = vmatprep.subr.bf16.mxu0 0
      %1028 = vmatpush1.bf16.xpose.msra.mxu0 %v777
      %1029 = vmatprep.subr.bf16.mxu0 0
      %1030 = vmatpush1.bf16.xpose.msra.mxu0 0
      %1031 = vmatprep.subr.bf16.mxu0 0
      %1032 = vmatpush1.bf16.xpose.msra.mxu0 0
      %1033 = vmatprep.subr.bf16.mxu0 0
      %1034 = vmatpush1.bf16.xpose.msra.mxu0 0
      %1035 = vmatprep.subr.bf16.mxu0 0
      %1036 = vmatpush1.bf16.xpose.msra.mxu0 0
      %1037 = vmatprep.subr.bf16.mxu0 0
      %1038 = vmatpush1.bf16.xpose.msra.mxu0 0
      %1039 = vmatprep.subr.bf16.mxu0 0
      %1040 = vmatpush1.bf16.xpose.msra.mxu0 0
      %1041 = vmatprep.subr.bf16.mxu0 0
      %1042 = vmatpush1.bf16.xpose.msra.mxu0 0
      %1043 = vmatprep.subr.bf16.mxu0 0
      %1044 = vmatpush1.bf16.xpose.msra.mxu0 0
      %1045 = vmatprep.subr.bf16.mxu0 0
      %1046 = vmatpush1.bf16.xpose.msra.mxu0 0
      %1047 = vmatprep.subr.bf16.mxu0 0
      %1048 = vmatpush1.bf16.xpose.msra.mxu0 0
      %1049 = vmatprep.subr.bf16.mxu0 0
      %1050 = vmatpush1.bf16.xpose.msra.mxu0 0
      %1051 = vmatprep.subr.bf16.mxu0 0
      %1052 = vmatpush1.bf16.xpose.msra.mxu0 0
      %1053 = vmatprep.subr.bf16.mxu0 0
      %1054 = vmatpush1.bf16.xpose.msra.mxu0 0
      %1055 = vmatprep.subr.bf16.mxu0 0
      %1056 = vmatpush1.bf16.xpose.msra.mxu0 0
      %1057 = vmatprep.subr.bf16.mxu0 0
      %1058 = vmatpush1.bf16.xpose.msra.mxu0 0
      %1059 = vmatprep.mubr.bf16.mxu0 0
      %1060 = vmatmul.mubr.bf16.gmra.mrb[0].mxu0 %v945
      %v1061 = vpop.f32.mrb[0].mxu0
      %v1062 = vadd.f32 %v982, %v1061
      %v1063 = vpop.f32.mrb[0].mxu0
      %v1064 = vpop.f32.mrb[0].mxu0
      %v1065 = vpop.f32.mrb[0].mxu0
      %1066 = vdwg.mxu0
      %v1067 = vmul.f32 %v1022, 0.5
      %v1068 = vmul.f32 %v1062, 0.5
      %v1069 = vpack.c.bf16 %v1067, %v1067
      %v1070 = vpack.c.bf16 %v1068, %v1068
      %v1071 = vld [vmem:[%s2 + $0x20] sm:$0xf]
      %v1072 = vld [vmem:[%s2 + $0x24] sm:$0xf]
      %v1073 = vld [vmem:[%s2 + $0x28] sm:$0xf]
      %v1074 = vld [vmem:[%s2 + $0x2c] sm:$0xf]
      %v1075 = vld [vmem:[%s3 + $0x10] sm:$0x1]
      %v1076 = vpack.c.bf16 %v814, %v771
      %v1077 = vlaneseq
      %v1078 = vshrl.u32 %v1077, 7
      %v1079 = vsub.s32 0, %v1078
      %v1080 = vrot.slane %v1075, %v1079
      %v1085 = vunpack.c.l.b16 %v1071
      %v1086 = vunpack.c.l.b16 %v1072
      %v1087 = vunpack.c.l.b16 %v1073
      %v1088 = vunpack.c.l.b16 %v1074
      %v1089 = vpack.c.b16 %v1086, %v1085
      %v1090 = vpack.c.b16 %v1088, %v1087
      %v1094 = vsel %vm467, %v1076, 0
      %1096 = vmatprep.subr.bf16.mxu0 0
      %1097 = vmatpush1.bf16.msra.mxu0 %v1089
      %1098 = vmatprep.subr.bf16.mxu0 0
      %1099 = vmatpush1.bf16.msra.mxu0 %v1090
      %1100 = vmatprep.subr.bf16.mxu0 0
      %1101 = vmatpush1.bf16.msra.mxu0 0
      %1102 = vmatprep.subr.bf16.mxu0 0
      %1103 = vmatpush1.bf16.msra.mxu0 0
      %1104 = vmatprep.subr.bf16.mxu0 0
      %1105 = vmatpush1.bf16.msra.mxu0 0
      %1106 = vmatprep.subr.bf16.mxu0 0
      %1107 = vmatpush1.bf16.msra.mxu0 0
      %1108 = vmatprep.subr.bf16.mxu0 0
      %1109 = vmatpush1.bf16.msra.mxu0 0
      %1110 = vmatprep.subr.bf16.mxu0 0
      %1111 = vmatpush1.bf16.msra.mxu0 0
      %1112 = vmatprep.subr.bf16.mxu0 0
      %1113 = vmatpush1.bf16.msra.mxu0 0
      %1114 = vmatprep.subr.bf16.mxu0 0
      %1115 = vmatpush1.bf16.msra.mxu0 0
      %1116 = vmatprep.subr.bf16.mxu0 0
      %1117 = vmatpush1.bf16.msra.mxu0 0
      %1118 = vmatprep.subr.bf16.mxu0 0
      %1119 = vmatpush1.bf16.msra.mxu0 0
      %1120 = vmatprep.subr.bf16.mxu0 0
      %1121 = vmatpush1.bf16.msra.mxu0 0
      %1122 = vmatprep.subr.bf16.mxu0 0
      %1123 = vmatpush1.bf16.msra.mxu0 0
      %1124 = vmatprep.subr.bf16.mxu0 0
      %1125 = vmatpush1.bf16.msra.mxu0 0
      %1126 = vmatprep.subr.bf16.mxu0 0
      %1127 = vmatpush1.bf16.msra.mxu0 0
      %1128 = vmatprep.mubr.bf16.mxu0 0
      %1129 = vmatmul.mubr.bf16.gmra.mrb[0].mxu0 %v1094
      %v1130 = vpop.f32.mrb[0].mxu0
      %v1131 = vadd.f32 %v1080, %v1130
      %v1132 = vpop.f32.mrb[0].mxu0
      %v1133 = vpop.f32.mrb[0].mxu0
      %v1134 = vadd.f32 %v1080, %v1133
      %v1135 = vpop.f32.mrb[0].mxu0
      %1136 = vdwg.mxu0
      %v1137 = vpack.c.bf16 %v1131, %v1131
      %v1138 = vpack.c.bf16 %v1134, %v1134
      %v1140 = vsel %vm289, %v1069, 0
      %v1143 = vsel %vm296, %v1137, 0
      %1145 = vmatprep.subr.bf16.mxu0 0
      %1146 = vmatpush1.bf16.msra.mxu0 %v1143
      %1147 = vmatprep.subr.bf16.mxu0 0
      %1148 = vmatpush1.bf16.msra.mxu0 0
      %1149 = vmatprep.subr.bf16.mxu0 0
      %1150 = vmatpush1.bf16.msra.mxu0 0
      %1151 = vmatprep.subr.bf16.mxu0 0
      %1152 = vmatpush1.bf16.msra.mxu0 0
      %1153 = vmatprep.subr.bf16.mxu0 0
      %1154 = vmatpush1.bf16.msra.mxu0 0
      %1155 = vmatprep.subr.bf16.mxu0 0
      %1156 = vmatpush1.bf16.msra.mxu0 0
      %1157 = vmatprep.subr.bf16.mxu0 0
      %1158 = vmatpush1.bf16.msra.mxu0 0
      %1159 = vmatprep.subr.bf16.mxu0 0
      %1160 = vmatpush1.bf16.msra.mxu0 0
      %1161 = vmatprep.subr.bf16.mxu0 0
      %1162 = vmatpush1.bf16.msra.mxu0 0
      %1163 = vmatprep.subr.bf16.mxu0 0
      %1164 = vmatpush1.bf16.msra.mxu0 0
      %1165 = vmatprep.subr.bf16.mxu0 0
      %1166 = vmatpush1.bf16.msra.mxu0 0
      %1167 = vmatprep.subr.bf16.mxu0 0
      %1168 = vmatpush1.bf16.msra.mxu0 0
      %1169 = vmatprep.subr.bf16.mxu0 0
      %1170 = vmatpush1.bf16.msra.mxu0 0
      %1171 = vmatprep.subr.bf16.mxu0 0
      %1172 = vmatpush1.bf16.msra.mxu0 0
      %1173 = vmatprep.subr.bf16.mxu0 0
      %1174 = vmatpush1.bf16.msra.mxu0 0
      %1175 = vmatprep.subr.bf16.mxu0 0
      %1176 = vmatpush1.bf16.msra.mxu0 0
      %1177 = vmatprep.mubr.bf16.mxu0 0
      %1178 = vmatmul.mubr.bf16.gmra.mrb[0].mxu0 %v1140
      %v1179 = vpop.f32.mrb[0].mxu0
      %v1180 = vadd.f32 0.0, %v1179
      %v1181 = vpop.f32.mrb[0].mxu0
      %v1182 = vpop.f32.mrb[0].mxu0
      %v1183 = vpop.f32.mrb[0].mxu0
      %1184 = vdwg.mxu0
      %v1186 = vsel %vm289, %v1070, 0
      %v1189 = vsel %vm296, %v1138, 0
      %1191 = vmatprep.subr.bf16.mxu0 0
      %1192 = vmatpush1.bf16.msra.mxu0 %v1189
      %1193 = vmatprep.subr.bf16.mxu0 0
      %1194 = vmatpush1.bf16.msra.mxu0 0
      %1195 = vmatprep.subr.bf16.mxu0 0
      %1196 = vmatpush1.bf16.msra.mxu0 0
      %1197 = vmatprep.subr.bf16.mxu0 0
      %1198 = vmatpush1.bf16.msra.mxu0 0
      %1199 = vmatprep.subr.bf16.mxu0 0
      %1200 = vmatpush1.bf16.msra.mxu0 0
      %1201 = vmatprep.subr.bf16.mxu0 0
      %1202 = vmatpush1.bf16.msra.mxu0 0
      %1203 = vmatprep.subr.bf16.mxu0 0
      %1204 = vmatpush1.bf16.msra.mxu0 0
      %1205 = vmatprep.subr.bf16.mxu0 0
      %1206 = vmatpush1.bf16.msra.mxu0 0
      %1207 = vmatprep.subr.bf16.mxu0 0
      %1208 = vmatpush1.bf16.msra.mxu0 0
      %1209 = vmatprep.subr.bf16.mxu0 0
      %1210 = vmatpush1.bf16.msra.mxu0 0
      %1211 = vmatprep.subr.bf16.mxu0 0
      %1212 = vmatpush1.bf16.msra.mxu0 0
      %1213 = vmatprep.subr.bf16.mxu0 0
      %1214 = vmatpush1.bf16.msra.mxu0 0
      %1215 = vmatprep.subr.bf16.mxu0 0
      %1216 = vmatpush1.bf16.msra.mxu0 0
      %1217 = vmatprep.subr.bf16.mxu0 0
      %1218 = vmatpush1.bf16.msra.mxu0 0
      %1219 = vmatprep.subr.bf16.mxu0 0
      %1220 = vmatpush1.bf16.msra.mxu0 0
      %1221 = vmatprep.subr.bf16.mxu0 0
      %1222 = vmatpush1.bf16.msra.mxu0 0
      %1223 = vmatprep.mubr.bf16.mxu0 0
      %1224 = vmatmul.mubr.bf16.gmra.mrb[0].mxu0 %v1186
      %v1225 = vpop.f32.mrb[0].mxu0
      %v1226 = vadd.f32 0.0, %v1225
      %v1227 = vpop.f32.mrb[0].mxu0
      %v1228 = vpop.f32.mrb[0].mxu0
      %v1229 = vpop.f32.mrb[0].mxu0
      %1230 = vdwg.mxu0
      %v1231 = vld [vmem:[%s2 + $0x30] sm:$0x3]
      %v1232 = vld [vmem:[%s3 + $0x20] sm:$0xf]
      %v1233 = vpack.c.bf16 %v1180, %v1180
      %v1234 = vpack.c.bf16 %v1226, %v1226
      %1236 = vset.pattern.permute.xlu0 0
      %1237 = vperm.xlu0 %1236, %v1232
      %v1238 = vpop.permute.xlu0 %1237
      %1240 = vmatprep.subr.bf16.mxu0 0
      %1241 = vmatpush1.bf16.xpose.msra.mxu0 %v1233
      %1242 = vmatprep.subr.bf16.mxu0 0
      %1243 = vmatpush1.bf16.xpose.msra.mxu0 0
      %1244 = vmatprep.subr.bf16.mxu0 0
      %1245 = vmatpush1.bf16.xpose.msra.mxu0 0
      %1246 = vmatprep.subr.bf16.mxu0 0
      %1247 = vmatpush1.bf16.xpose.msra.mxu0 0
      %1248 = vmatprep.subr.bf16.mxu0 0
      %1249 = vmatpush1.bf16.xpose.msra.mxu0 0
      %1250 = vmatprep.subr.bf16.mxu0 0
      %1251 = vmatpush1.bf16.xpose.msra.mxu0 0
      %1252 = vmatprep.subr.bf16.mxu0 0
      %1253 = vmatpush1.bf16.xpose.msra.mxu0 0
      %1254 = vmatprep.subr.bf16.mxu0 0
      %1255 = vmatpush1.bf16.xpose.msra.mxu0 0
      %1256 = vmatprep.subr.bf16.mxu0 0
      %1257 = vmatpush1.bf16.xpose.msra.mxu0 0
      %1258 = vmatprep.subr.bf16.mxu0 0
      %1259 = vmatpush1.bf16.xpose.msra.mxu0 0
      %1260 = vmatprep.subr.bf16.mxu0 0
      %1261 = vmatpush1.bf16.xpose.msra.mxu0 0
      %1262 = vmatprep.subr.bf16.mxu0 0
      %1263 = vmatpush1.bf16.xpose.msra.mxu0 0
      %1264 = vmatprep.subr.bf16.mxu0 0
      %1265 = vmatpush1.bf16.xpose.msra.mxu0 0
      %1266 = vmatprep.subr.bf16.mxu0 0
      %1267 = vmatpush1.bf16.xpose.msra.mxu0 0
      %1268 = vmatprep.subr.bf16.mxu0 0
      %1269 = vmatpush1.bf16.xpose.msra.mxu0 0
      %1270 = vmatprep.subr.bf16.mxu0 0
      %1271 = vmatpush1.bf16.xpose.msra.mxu0 0
      %1272 = vmatprep.mubr.bf16.mxu0 0
      %1273 = vmatmul.mubr.bf16.gmra.mrb[0].mxu0 %v1231
      %v1274 = vpop.f32.mrb[0].mxu0
      %v1275 = vadd.f32 %v1238, %v1274
      %v1276 = vpop.f32.mrb[0].mxu0
      %v1277 = vpop.f32.mrb[0].mxu0
      %v1278 = vpop.f32.mrb[0].mxu0
      %1279 = vdwg.mxu0
      %1280 = vmatprep.subr.bf16.mxu0 0
      %1281 = vmatpush1.bf16.xpose.msra.mxu0 %v1234
      %1282 = vmatprep.subr.bf16.mxu0 0
      %1283 = vmatpush1.bf16.xpose.msra.mxu0 0
      %1284 = vmatprep.subr.bf16.mxu0 0
      %1285 = vmatpush1.bf16.xpose.msra.mxu0 0
      %1286 = vmatprep.subr.bf16.mxu0 0
      %1287 = vmatpush1.bf16.xpose.msra.mxu0 0
      %1288 = vmatprep.subr.bf16.mxu0 0
      %1289 = vmatpush1.bf16.xpose.msra.mxu0 0
      %1290 = vmatprep.subr.bf16.mxu0 0
      %1291 = vmatpush1.bf16.xpose.msra.mxu0 0
      %1292 = vmatprep.subr.bf16.mxu0 0
      %1293 = vmatpush1.bf16.xpose.msra.mxu0 0
      %1294 = vmatprep.subr.bf16.mxu0 0
      %1295 = vmatpush1.bf16.xpose.msra.mxu0 0
      %1296 = vmatprep.subr.bf16.mxu0 0
      %1297 = vmatpush1.bf16.xpose.msra.mxu0 0
      %1298 = vmatprep.subr.bf16.mxu0 0
      %1299 = vmatpush1.bf16.xpose.msra.mxu0 0
      %1300 = vmatprep.subr.bf16.mxu0 0
      %1301 = vmatpush1.bf16.xpose.msra.mxu0 0
      %1302 = vmatprep.subr.bf16.mxu0 0
      %1303 = vmatpush1.bf16.xpose.msra.mxu0 0
      %1304 = vmatprep.subr.bf16.mxu0 0
      %1305 = vmatpush1.bf16.xpose.msra.mxu0 0
      %1306 = vmatprep.subr.bf16.mxu0 0
      %1307 = vmatpush1.bf16.xpose.msra.mxu0 0
      %1308 = vmatprep.subr.bf16.mxu0 0
      %1309 = vmatpush1.bf16.xpose.msra.mxu0 0
      %1310 = vmatprep.subr.bf16.mxu0 0
      %1311 = vmatpush1.bf16.xpose.msra.mxu0 0
      %1312 = vmatprep.mubr.bf16.mxu0 0
      %1313 = vmatmul.mubr.bf16.gmra.mrb[0].mxu0 %v1231
      %v1314 = vpop.f32.mrb[0].mxu0
      %v1315 = vadd.f32 %v1238, %v1314
      %v1316 = vpop.f32.mrb[0].mxu0
      %v1317 = vpop.f32.mrb[0].mxu0
      %v1318 = vpop.f32.mrb[0].mxu0
      %1319 = vdwg.mxu0
      %vm1320 = vcmask 60416
      %v1321 = vsel %vm1320, %v1275, -inf
      %1322 = vmax.xlane.f32.xlu0 %v1321
      %v1323 = vpop.xlane.xlu0 %1322
      %v1324 = vsel %vm1320, %v1315, -inf
      %1325 = vmax.xlane.f32.xlu0 %v1324
      %v1326 = vpop.xlane.xlu0 %1325
      %v1327 = vsub.f32 %v1275, %v1323
      %v1328 = vsub.f32 %v1315, %v1326
      %v1329 = vmul.f32 %v1327, 1.442695
      %v1330 = vpow.pop %v1329
      %v1331 = vmul.f32 %v1328, 1.442695
      %v1332 = vpow.pop %v1331
      %v1333 = vsel %vm1320, %v1330, 0.0
      %1334 = vadd.xlane.f32.xlu0 %v1333
      %v1335 = vpop.xlane.xlu0 %1334
      %v1336 = vsel %vm1320, %v1332, 0.0
      %1337 = vadd.xlane.f32.xlu0 %v1336
      %v1338 = vpop.xlane.xlu0 %1337
      %v1339 = vrcp.pop %v1335
      %v1340 = vmul.f32 %v1330, %v1339
      %v1341 = vrcp.pop %v1338
      %v1342 = vmul.f32 %v1332, %v1341
      %v1343 = vpack.c.bf16 %v1340, %v1340
      %v1344 = vpack.c.bf16 %v1342, %v1342
      %v1346 = vsel %vm289, %v1343, 0
      %v1349 = vsel %vm296, %v1233, 0
      %1351 = vmatprep.subr.bf16.mxu0 0
      %1352 = vmatpush1.bf16.msra.mxu0 %v1349
      %1353 = vmatprep.subr.bf16.mxu0 0
      %1354 = vmatpush1.bf16.msra.mxu0 0
      %1355 = vmatprep.subr.bf16.mxu0 0
      %1356 = vmatpush1.bf16.msra.mxu0 0
      %1357 = vmatprep.subr.bf16.mxu0 0
      %1358 = vmatpush1.bf16.msra.mxu0 0
      %1359 = vmatprep.subr.bf16.mxu0 0
      %1360 = vmatpush1.bf16.msra.mxu0 0
      %1361 = vmatprep.subr.bf16.mxu0 0
      %1362 = vmatpush1.bf16.msra.mxu0 0
      %1363 = vmatprep.subr.bf16.mxu0 0
      %1364 = vmatpush1.bf16.msra.mxu0 0
      %1365 = vmatprep.subr.bf16.mxu0 0
      %1366 = vmatpush1.bf16.msra.mxu0 0
      %1367 = vmatprep.subr.bf16.mxu0 0
      %1368 = vmatpush1.bf16.msra.mxu0 0
      %1369 = vmatprep.subr.bf16.mxu0 0
      %1370 = vmatpush1.bf16.msra.mxu0 0
      %1371 = vmatprep.subr.bf16.mxu0 0
      %1372 = vmatpush1.bf16.msra.mxu0 0
      %1373 = vmatprep.subr.bf16.mxu0 0
      %1374 = vmatpush1.bf16.msra.mxu0 0
      %1375 = vmatprep.subr.bf16.mxu0 0
      %1376 = vmatpush1.bf16.msra.mxu0 0
      %1377 = vmatprep.subr.bf16.mxu0 0
      %1378 = vmatpush1.bf16.msra.mxu0 0
      %1379 = vmatprep.subr.bf16.mxu0 0
      %1380 = vmatpush1.bf16.msra.mxu0 0
      %1381 = vmatprep.subr.bf16.mxu0 0
      %1382 = vmatpush1.bf16.msra.mxu0 0
      %1383 = vmatprep.mubr.bf16.mxu0 0
      %1384 = vmatmul.mubr.bf16.gmra.mrb[0].mxu0 %v1346
      %v1385 = vpop.f32.mrb[0].mxu0
      %v1386 = vadd.f32 0.0, %v1385
      %v1387 = vpop.f32.mrb[0].mxu0
      %v1388 = vpop.f32.mrb[0].mxu0
      %v1389 = vpop.f32.mrb[0].mxu0
      %1390 = vdwg.mxu0
      %v1392 = vsel %vm289, %v1344, 0
      %v1395 = vsel %vm296, %v1234, 0
      %1397 = vmatprep.subr.bf16.mxu0 0
      %1398 = vmatpush1.bf16.msra.mxu0 %v1395
      %1399 = vmatprep.subr.bf16.mxu0 0
      %1400 = vmatpush1.bf16.msra.mxu0 0
      %1401 = vmatprep.subr.bf16.mxu0 0
      %1402 = vmatpush1.bf16.msra.mxu0 0
      %1403 = vmatprep.subr.bf16.mxu0 0
      %1404 = vmatpush1.bf16.msra.mxu0 0
      %1405 = vmatprep.subr.bf16.mxu0 0
      %1406 = vmatpush1.bf16.msra.mxu0 0
      %1407 = vmatprep.subr.bf16.mxu0 0
      %1408 = vmatpush1.bf16.msra.mxu0 0
      %1409 = vmatprep.subr.bf16.mxu0 0
      %1410 = vmatpush1.bf16.msra.mxu0 0
      %1411 = vmatprep.subr.bf16.mxu0 0
      %1412 = vmatpush1.bf16.msra.mxu0 0
      %1413 = vmatprep.subr.bf16.mxu0 0
      %1414 = vmatpush1.bf16.msra.mxu0 0
      %1415 = vmatprep.subr.bf16.mxu0 0
      %1416 = vmatpush1.bf16.msra.mxu0 0
      %1417 = vmatprep.subr.bf16.mxu0 0
      %1418 = vmatpush1.bf16.msra.mxu0 0
      %1419 = vmatprep.subr.bf16.mxu0 0
      %1420 = vmatpush1.bf16.msra.mxu0 0
      %1421 = vmatprep.subr.bf16.mxu0 0
      %1422 = vmatpush1.bf16.msra.mxu0 0
      %1423 = vmatprep.subr.bf16.mxu0 0
      %1424 = vmatpush1.bf16.msra.mxu0 0
      %1425 = vmatprep.subr.bf16.mxu0 0
      %1426 = vmatpush1.bf16.msra.mxu0 0
      %1427 = vmatprep.subr.bf16.mxu0 0
      %1428 = vmatpush1.bf16.msra.mxu0 0
      %1429 = vmatprep.mubr.bf16.mxu0 0
      %1430 = vmatmul.mubr.bf16.gmra.mrb[0].mxu0 %v1392
      %v1431 = vpop.f32.mrb[0].mxu0
      %v1432 = vadd.f32 0.0, %v1431
      %v1433 = vpop.f32.mrb[0].mxu0
      %v1434 = vpop.f32.mrb[0].mxu0
      %v1435 = vpop.f32.mrb[0].mxu0
      %1436 = vdwg.mxu0
      %v1437 = vsel %vm296, %v1069, 0
      %1439 = vmatprep.subr.bf16.mxu0 0
      %1440 = vmatpush1.bf16.msra.mxu0 %v1437
      %1441 = vmatprep.subr.bf16.mxu0 0
      %1442 = vmatpush1.bf16.msra.mxu0 0
      %1443 = vmatprep.subr.bf16.mxu0 0
      %1444 = vmatpush1.bf16.msra.mxu0 0
      %1445 = vmatprep.subr.bf16.mxu0 0
      %1446 = vmatpush1.bf16.msra.mxu0 0
      %1447 = vmatprep.subr.bf16.mxu0 0
      %1448 = vmatpush1.bf16.msra.mxu0 0
      %1449 = vmatprep.subr.bf16.mxu0 0
      %1450 = vmatpush1.bf16.msra.mxu0 0
      %1451 = vmatprep.subr.bf16.mxu0 0
      %1452 = vmatpush1.bf16.msra.mxu0 0
      %1453 = vmatprep.subr.bf16.mxu0 0
      %1454 = vmatpush1.bf16.msra.mxu0 0
      %1455 = vmatprep.subr.bf16.mxu0 0
      %1456 = vmatpush1.bf16.msra.mxu0 0
      %1457 = vmatprep.subr.bf16.mxu0 0
      %1458 = vmatpush1.bf16.msra.mxu0 0
      %1459 = vmatprep.subr.bf16.mxu0 0
      %1460 = vmatpush1.bf16.msra.mxu0 0
      %1461 = vmatprep.subr.bf16.mxu0 0
      %1462 = vmatpush1.bf16.msra.mxu0 0
      %1463 = vmatprep.subr.bf16.mxu0 0
      %1464 = vmatpush1.bf16.msra.mxu0 0
      %1465 = vmatprep.subr.bf16.mxu0 0
      %1466 = vmatpush1.bf16.msra.mxu0 0
      %1467 = vmatprep.subr.bf16.mxu0 0
      %1468 = vmatpush1.bf16.msra.mxu0 0
      %1469 = vmatprep.subr.bf16.mxu0 0
      %1470 = vmatpush1.bf16.msra.mxu0 0
      %1471 = vmatprep.mubr.bf16.mxu0 0
      %1472 = vmatmul.mubr.bf16.gmra.mrb[0].mxu0 %v1346
      %v1473 = vpop.f32.mrb[0].mxu0
      %v1474 = vadd.f32 0.0, %v1473
      %v1475 = vpop.f32.mrb[0].mxu0
      %v1476 = vpop.f32.mrb[0].mxu0
      %v1477 = vpop.f32.mrb[0].mxu0
      %1478 = vdwg.mxu0
      %v1479 = vsel %vm296, %v1070, 0
      %1481 = vmatprep.subr.bf16.mxu0 0
      %1482 = vmatpush1.bf16.msra.mxu0 %v1479
      %1483 = vmatprep.subr.bf16.mxu0 0
      %1484 = vmatpush1.bf16.msra.mxu0 0
      %1485 = vmatprep.subr.bf16.mxu0 0
      %1486 = vmatpush1.bf16.msra.mxu0 0
      %1487 = vmatprep.subr.bf16.mxu0 0
      %1488 = vmatpush1.bf16.msra.mxu0 0
      %1489 = vmatprep.subr.bf16.mxu0 0
      %1490 = vmatpush1.bf16.msra.mxu0 0
      %1491 = vmatprep.subr.bf16.mxu0 0
      %1492 = vmatpush1.bf16.msra.mxu0 0
      %1493 = vmatprep.subr.bf16.mxu0 0
      %1494 = vmatpush1.bf16.msra.mxu0 0
      %1495 = vmatprep.subr.bf16.mxu0 0
      %1496 = vmatpush1.bf16.msra.mxu0 0
      %1497 = vmatprep.subr.bf16.mxu0 0
      %1498 = vmatpush1.bf16.msra.mxu0 0
      %1499 = vmatprep.subr.bf16.mxu0 0
      %1500 = vmatpush1.bf16.msra.mxu0 0
      %1501 = vmatprep.subr.bf16.mxu0 0
      %1502 = vmatpush1.bf16.msra.mxu0 0
      %1503 = vmatprep.subr.bf16.mxu0 0
      %1504 = vmatpush1.bf16.msra.mxu0 0
      %1505 = vmatprep.subr.bf16.mxu0 0
      %1506 = vmatpush1.bf16.msra.mxu0 0
      %1507 = vmatprep.subr.bf16.mxu0 0
      %1508 = vmatpush1.bf16.msra.mxu0 0
      %1509 = vmatprep.subr.bf16.mxu0 0
      %1510 = vmatpush1.bf16.msra.mxu0 0
      %1511 = vmatprep.subr.bf16.mxu0 0
      %1512 = vmatpush1.bf16.msra.mxu0 0
      %1513 = vmatprep.mubr.bf16.mxu0 0
      %1514 = vmatmul.mubr.bf16.gmra.mrb[0].mxu0 %v1392
      %v1515 = vpop.f32.mrb[0].mxu0
      %v1516 = vadd.f32 0.0, %v1515
      %v1517 = vpop.f32.mrb[0].mxu0
      %v1518 = vpop.f32.mrb[0].mxu0
      %v1519 = vpop.f32.mrb[0].mxu0
      %1520 = vdwg.mxu0
      %v1521 = vpack.c.bf16 %v1474, %v1474
      %v1522 = vpack.c.bf16 %v1516, %v1516
      %v1524 = vsel %vm289, %v1521, 0
      %1526 = vmatprep.subr.bf16.mxu0 0
      %1527 = vmatpush1.bf16.xpose.msra.mxu0 %v1524
      %1528 = vmatprep.subr.bf16.mxu0 0
      %1529 = vmatpush1.bf16.xpose.msra.mxu0 0
      %1530 = vmatprep.subr.bf16.mxu0 0
      %1531 = vmatpush1.bf16.xpose.msra.mxu0 0
      %1532 = vmatprep.subr.bf16.mxu0 0
      %1533 = vmatpush1.bf16.xpose.msra.mxu0 0
      %1534 = vmatprep.subr.bf16.mxu0 0
      %1535 = vmatpush1.bf16.xpose.msra.mxu0 0
      %1536 = vmatprep.subr.bf16.mxu0 0
      %1537 = vmatpush1.bf16.xpose.msra.mxu0 0
      %1538 = vmatprep.subr.bf16.mxu0 0
      %1539 = vmatpush1.bf16.xpose.msra.mxu0 0
      %1540 = vmatprep.subr.bf16.mxu0 0
      %1541 = vmatpush1.bf16.xpose.msra.mxu0 0
      %1542 = vmatprep.subr.bf16.mxu0 0
      %1543 = vmatpush1.bf16.xpose.msra.mxu0 0
      %1544 = vmatprep.subr.bf16.mxu0 0
      %1545 = vmatpush1.bf16.xpose.msra.mxu0 0
      %1546 = vmatprep.subr.bf16.mxu0 0
      %1547 = vmatpush1.bf16.xpose.msra.mxu0 0
      %1548 = vmatprep.subr.bf16.mxu0 0
      %1549 = vmatpush1.bf16.xpose.msra.mxu0 0
      %1550 = vmatprep.subr.bf16.mxu0 0
      %1551 = vmatpush1.bf16.xpose.msra.mxu0 0
      %1552 = vmatprep.subr.bf16.mxu0 0
      %1553 = vmatpush1.bf16.xpose.msra.mxu0 0
      %1554 = vmatprep.subr.bf16.mxu0 0
      %1555 = vmatpush1.bf16.xpose.msra.mxu0 0
      %1556 = vmatprep.subr.bf16.mxu0 0
      %1557 = vmatpush1.bf16.xpose.msra.mxu0 0
      %1558 = vmatprep.mubr.bf16.mxu0 0
      %1559 = vmatmul.mubr.bf16.gmra.mrb[0].mxu0 %v1346
      %v1560 = vpop.f32.mrb[0].mxu0
      %v1561 = vadd.f32 0.0, %v1560
      %v1562 = vpop.f32.mrb[0].mxu0
      %v1563 = vpop.f32.mrb[0].mxu0
      %v1564 = vpop.f32.mrb[0].mxu0
      %1565 = vdwg.mxu0
      %v1567 = vsel %vm289, %v1522, 0
      %1569 = vmatprep.subr.bf16.mxu0 0
      %1570 = vmatpush1.bf16.xpose.msra.mxu0 %v1567
      %1571 = vmatprep.subr.bf16.mxu0 0
      %1572 = vmatpush1.bf16.xpose.msra.mxu0 0
      %1573 = vmatprep.subr.bf16.mxu0 0
      %1574 = vmatpush1.bf16.xpose.msra.mxu0 0
      %1575 = vmatprep.subr.bf16.mxu0 0
      %1576 = vmatpush1.bf16.xpose.msra.mxu0 0
      %1577 = vmatprep.subr.bf16.mxu0 0
      %1578 = vmatpush1.bf16.xpose.msra.mxu0 0
      %1579 = vmatprep.subr.bf16.mxu0 0
      %1580 = vmatpush1.bf16.xpose.msra.mxu0 0
      %1581 = vmatprep.subr.bf16.mxu0 0
      %1582 = vmatpush1.bf16.xpose.msra.mxu0 0
      %1583 = vmatprep.subr.bf16.mxu0 0
      %1584 = vmatpush1.bf16.xpose.msra.mxu0 0
      %1585 = vmatprep.subr.bf16.mxu0 0
      %1586 = vmatpush1.bf16.xpose.msra.mxu0 0
      %1587 = vmatprep.subr.bf16.mxu0 0
      %1588 = vmatpush1.bf16.xpose.msra.mxu0 0
      %1589 = vmatprep.subr.bf16.mxu0 0
      %1590 = vmatpush1.bf16.xpose.msra.mxu0 0
      %1591 = vmatprep.subr.bf16.mxu0 0
      %1592 = vmatpush1.bf16.xpose.msra.mxu0 0
      %1593 = vmatprep.subr.bf16.mxu0 0
      %1594 = vmatpush1.bf16.xpose.msra.mxu0 0
      %1595 = vmatprep.subr.bf16.mxu0 0
      %1596 = vmatpush1.bf16.xpose.msra.mxu0 0
      %1597 = vmatprep.subr.bf16.mxu0 0
      %1598 = vmatpush1.bf16.xpose.msra.mxu0 0
      %1599 = vmatprep.subr.bf16.mxu0 0
      %1600 = vmatpush1.bf16.xpose.msra.mxu0 0
      %1601 = vmatprep.mubr.bf16.mxu0 0
      %1602 = vmatmul.mubr.bf16.gmra.mrb[0].mxu0 %v1392
      %v1603 = vpop.f32.mrb[0].mxu0
      %v1604 = vadd.f32 0.0, %v1603
      %v1605 = vpop.f32.mrb[0].mxu0
      %v1606 = vpop.f32.mrb[0].mxu0
      %v1607 = vpop.f32.mrb[0].mxu0
      %1608 = vdwg.mxu0
      %1609 = vmatprep.subr.bf16.mxu0 0
      %1610 = vmatpush1.bf16.xpose.msra.mxu0 %v1346
      %1611 = vmatprep.subr.bf16.mxu0 0
      %1612 = vmatpush1.bf16.xpose.msra.mxu0 0
      %1613 = vmatprep.subr.bf16.mxu0 0
      %1614 = vmatpush1.bf16.xpose.msra.mxu0 0
      %1615 = vmatprep.subr.bf16.mxu0 0
      %1616 = vmatpush1.bf16.xpose.msra.mxu0 0
      %1617 = vmatprep.subr.bf16.mxu0 0
      %1618 = vmatpush1.bf16.xpose.msra.mxu0 0
      %1619 = vmatprep.subr.bf16.mxu0 0
      %1620 = vmatpush1.bf16.xpose.msra.mxu0 0
      %1621 = vmatprep.subr.bf16.mxu0 0
      %1622 = vmatpush1.bf16.xpose.msra.mxu0 0
      %1623 = vmatprep.subr.bf16.mxu0 0
      %1624 = vmatpush1.bf16.xpose.msra.mxu0 0
      %1625 = vmatprep.subr.bf16.mxu0 0
      %1626 = vmatpush1.bf16.xpose.msra.mxu0 0
      %1627 = vmatprep.subr.bf16.mxu0 0
      %1628 = vmatpush1.bf16.xpose.msra.mxu0 0
      %1629 = vmatprep.subr.bf16.mxu0 0
      %1630 = vmatpush1.bf16.xpose.msra.mxu0 0
      %1631 = vmatprep.subr.bf16.mxu0 0
      %1632 = vmatpush1.bf16.xpose.msra.mxu0 0
      %1633 = vmatprep.subr.bf16.mxu0 0
      %1634 = vmatpush1.bf16.xpose.msra.mxu0 0
      %1635 = vmatprep.subr.bf16.mxu0 0
      %1636 = vmatpush1.bf16.xpose.msra.mxu0 0
      %1637 = vmatprep.subr.bf16.mxu0 0
      %1638 = vmatpush1.bf16.xpose.msra.mxu0 0
      %1639 = vmatprep.subr.bf16.mxu0 0
      %1640 = vmatpush1.bf16.xpose.msra.mxu0 0
      %1641 = vmatprep.mubr.bf16.mxu0 0
      %1642 = vmatmul.mubr.bf16.gmra.mrb[0].mxu0 %v1524
      %v1643 = vpop.f32.mrb[0].mxu0
      %v1644 = vadd.f32 %v1561, %v1643
      %v1645 = vpop.f32.mrb[0].mxu0
      %v1646 = vpop.f32.mrb[0].mxu0
      %v1647 = vpop.f32.mrb[0].mxu0
      %1648 = vdwg.mxu0
      %1649 = vmatprep.subr.bf16.mxu0 0
      %1650 = vmatpush1.bf16.xpose.msra.mxu0 %v1392
      %1651 = vmatprep.subr.bf16.mxu0 0
      %1652 = vmatpush1.bf16.xpose.msra.mxu0 0
      %1653 = vmatprep.subr.bf16.mxu0 0
      %1654 = vmatpush1.bf16.xpose.msra.mxu0 0
      %1655 = vmatprep.subr.bf16.mxu0 0
      %1656 = vmatpush1.bf16.xpose.msra.mxu0 0
      %1657 = vmatprep.subr.bf16.mxu0 0
      %1658 = vmatpush1.bf16.xpose.msra.mxu0 0
      %1659 = vmatprep.subr.bf16.mxu0 0
      %1660 = vmatpush1.bf16.xpose.msra.mxu0 0
      %1661 = vmatprep.subr.bf16.mxu0 0
      %1662 = vmatpush1.bf16.xpose.msra.mxu0 0
      %1663 = vmatprep.subr.bf16.mxu0 0
      %1664 = vmatpush1.bf16.xpose.msra.mxu0 0
      %1665 = vmatprep.subr.bf16.mxu0 0
      %1666 = vmatpush1.bf16.xpose.msra.mxu0 0
      %1667 = vmatprep.subr.bf16.mxu0 0
      %1668 = vmatpush1.bf16.xpose.msra.mxu0 0
      %1669 = vmatprep.subr.bf16.mxu0 0
      %1670 = vmatpush1.bf16.xpose.msra.mxu0 0
      %1671 = vmatprep.subr.bf16.mxu0 0
      %1672 = vmatpush1.bf16.xpose.msra.mxu0 0
      %1673 = vmatprep.subr.bf16.mxu0 0
      %1674 = vmatpush1.bf16.xpose.msra.mxu0 0
      %1675 = vmatprep.subr.bf16.mxu0 0
      %1676 = vmatpush1.bf16.xpose.msra.mxu0 0
      %1677 = vmatprep.subr.bf16.mxu0 0
      %1678 = vmatpush1.bf16.xpose.msra.mxu0 0
      %1679 = vmatprep.subr.bf16.mxu0 0
      %1680 = vmatpush1.bf16.xpose.msra.mxu0 0
      %1681 = vmatprep.mubr.bf16.mxu0 0
      %1682 = vmatmul.mubr.bf16.gmra.mrb[0].mxu0 %v1567
      %v1683 = vpop.f32.mrb[0].mxu0
      %v1684 = vadd.f32 %v1604, %v1683
      %v1685 = vpop.f32.mrb[0].mxu0
      %v1686 = vpop.f32.mrb[0].mxu0
      %v1687 = vpop.f32.mrb[0].mxu0
      %1688 = vdwg.mxu0
      %v1689 = vmul.f32 %v1644, 0.5
      %v1690 = vmul.f32 %v1684, 0.5
      %v1691 = vmax.f32 %v1386, 0.0
      %v1692 = vmax.f32 %v1432, 0.0
      %v1693 = vmin.f32 %v1691, 1.0
      %v1694 = vmin.f32 %v1692, 1.0
      %v1695 = vmax.f32 %v1689, -1.0
      %v1696 = vmax.f32 %v1690, -1.0
      %v1697 = vmin.f32 %v1695, 1.0
      %v1698 = vmin.f32 %v1696, 1.0
      %1699 = vst [vmem:[%s262] sm:$0xff] 0.0
      %1700 = vst [vmem:[%s262 + $0x8] sm:$0xff] 0.0
      %1701 = vst [vmem:[%s268] sm:$0xff] 0.0
      %1702 = vst [vmem:[%s268 + $0x8] sm:$0xff] 0.0
      %1703 = vst [vmem:[%s262] sm:$0xf] %v1693
      %1704 = vst [vmem:[%s262 + $0x8] sm:$0xf] %v1694
      %vm1705 = vcmask 27648
      %1706 = vst.msk [vmem:[%s268] sm:$0xf] %vm1705, %v1697
      %1707 = vst.msk [vmem:[%s268 + $0x8] sm:$0xf] %vm1705, %v1698
      %s1708 = smul.u32 2, %s17
      %p1709 = scmp.lt.s32.totalorder %s1708, 3
      %s1710 = scalar_select %p1709, %s1708, 3
      %s1711 = smul.addr %s1710, 8
      %s1712 = scalar_lea.vmem %s4, %s1711
      %s1713 = smul.u32 2, %s17
      %p1714 = scmp.lt.s32.totalorder %s1713, 3
      %s1715 = scalar_select %p1714, %s1713, 3
      %s1716 = smul.addr %s1715, 8
      %s1717 = scalar_lea.vmem %s5, %s1716
      // Predicated region
      $region37: #{graph_encoder.1} parent=35 // pred_check
        %p1718 = pneg %p129
      $region38: #{graph_encoder.1} parent=35 // pred_check_branch
        %1720 = sbr.rel (%p1718) target = $region40
      $region39: #{graph_encoder.1} parent=35 // pred_region
        %s1721 = smul.u32 2, %s17
      $region40: #{graph_encoder.1} parent=35 // pred_fallthru
        _
      // Predicated region
      $region41: #{graph_encoder.1} parent=35 // pred_check
        %p1722 = pneg %p155
      $region42: #{graph_encoder.1} parent=35 // pred_check_branch
        %1724 = sbr.rel (%p1722) target = $region44
      $region43: #{graph_encoder.1} parent=35 // pred_region
        %s1725 = smul.u32 2, %s17
      $region44: #{graph_encoder.1} parent=35 // pred_fallthru
        _
    $region36: #{graph_encoder.1} parent=5 // pred_fallthru
      _
    %p1726 = scmp.le.s32.totalorder 2, %s12
    // Predicated region
    $region45: #{graph_encoder.1} parent=5 // pred_check
      %p1727 = pneg %p1726
    $region46: #{graph_encoder.1} parent=5 // pred_check_branch
      %1729 = sbr.rel (%p1727) target = $region48
    $region47: #{graph_encoder.1} parent=5 // pred_region
      %s1730 = ssub.s32 %s12, 2
      // Predicated region
      $region49: #{graph_encoder.1} parent=47 // pred_check
        %p1731 = pneg %p135
      $region50: #{graph_encoder.1} parent=47 // pred_check_branch
        %1733 = sbr.rel (%p1731) target = $region52
      $region51: #{graph_encoder.1} parent=47 // pred_region
        %s1734 = smul.u32 2, %s18
        %p1735 = scmp.lt.s32.totalorder %s1734, 3
        %s1736 = scalar_select %p1735, %s1734, 3
        %s1737 = smul.addr %s1736, 8
        %s1738 = scalar_lea.vmem %s4, %s1737
      $region52: #{graph_encoder.1} parent=47 // pred_fallthru
        _
      // Predicated region
      $region53: #{graph_encoder.1} parent=47 // pred_check
        %p1739 = pneg %p161
      $region54: #{graph_encoder.1} parent=47 // pred_check_branch
        %1741 = sbr.rel (%p1739) target = $region56
      $region55: #{graph_encoder.1} parent=47 // pred_region
        %s1742 = smul.u32 2, %s18
        %p1743 = scmp.lt.s32.totalorder %s1742, 3
        %s1744 = scalar_select %p1743, %s1742, 3
        %s1745 = smul.addr %s1744, 8
        %s1746 = scalar_lea.vmem %s5, %s1745
      $region56: #{graph_encoder.1} parent=47 // pred_fallthru
        _
    $region48: #{graph_encoder.1} parent=5 // pred_fallthru
      _
  $region6: #{graph_encoder.1} parent=0 // loop_footer
    %s16 = sadd.s32 1, %s12
  $region7: #{graph_encoder.1} parent=0 // loop_footer_branch
    %11 = sbr.rel target = $region3
  $region8: #{graph_encoder.1} parent=0 // loop_exit
    _

</llo_original>
